<compile_context>
chip_gen: v7x
topology: tpu7x:2x2x1
jax: 0.10.0
libtpu: 0.0.40
codegen_flags: <defaults>
</compile_context>

<pallas_src>
import functools

import jax
import jax.numpy as jnp
from jax.experimental import pallas as pl
from jax.experimental.pallas import tpu as pltpu


# ----------------------------------------------------------------------------
# helpers
# ----------------------------------------------------------------------------

def _round_up(n, m):
    return (n + m - 1) // m * m


def _cdiv(a, b):
    return -(-a // b)


def _align_feature(n):
    """Lane-dense feature padding: 128 for tiny dims, 256 otherwise (v6e/v7x
    MXUs are 2x256x256; odd multiples of 128 waste half of each MXU pass)."""
    if n <= 128:
        return 128
    return _round_up(n, 256)


@functools.lru_cache(maxsize=1)
def _vmem_budget_bytes():
    """~13/16 of per-core VMEM (~104 MiB on v5e/v6e's 128 MiB, ~52 MiB on
    v7x's 64 MiB), leaving headroom for compiler-internal scratch."""
    cap = 128 * 1024 * 1024
    try:
        cap = int(getattr(pltpu.get_tpu_info(), "vmem_capacity_bytes", cap))
    except Exception:
        pass
    return (cap * 13) // 16


def _pick_tile_h(hid_p, dim_p, budget):
    """Hidden-dim tile for the streaming plan: largest multiple of 256 (<=2048)
    that divides hid_p and keeps the double-buffered weight slices ~<= budget/2."""
    max_h = max(256, min(2048, ((budget // 2) // (8 * dim_p)) // 256 * 256))
    best = 128 if hid_p < 256 else 256
    for t in range(256, max_h + 1, 256):
        if hid_p % t == 0:
            best = t
    return best


def _select_plan(M, dim_p, hid_p, out_bytes, tile_m, budget, single_buffer_weights):
    tile_m = max(16, _round_up(tile_m, 16))
    # Row tile: multiple of 16 (bf16 packs two rows per sublane), clamped so
    # tiny batches are not padded to 256 rows and so that, when M allows it,
    # the row grid has >=2 steps for the two TensorCores on v7x.
    tm = min(tile_m, max(16, _round_up(_cdiv(M, 2), 16)))

    w_mult = 1 if single_buffer_weights else 2

    def resident_bytes(tm_):
        w = w_mult * 8 * dim_p * hid_p            # bf16 W1..W4 (single/double buffered)
        io = 2 * tm_ * dim_p * (2 + out_bytes)    # double-buffered x / out row tiles
        inter = 2 * tm_ * hid_p * 6               # f32 + bf16 intermediates (with slack)
        return w + io + inter

    limit = int(0.85 * budget)
    tile_h = _pick_tile_h(hid_p, dim_p, budget)
    if resident_bytes(tm) <= limit:
        return "resident", tm, tile_h
    if tm > 128 and resident_bytes(128) <= limit:
        return "resident", 128, tile_h            # shrink row tile before giving up
    return "ktiled", tm, tile_h


# ----------------------------------------------------------------------------
# plan A: fully VMEM-resident weights
# ----------------------------------------------------------------------------

def _mlp_resident_kernel(x_ref, w1_ref, w2_ref, b2_ref, w3_ref, w4_ref, b4_ref, o_ref):
    x = x_ref[...]                                                  # (tm, dim_p) bf16
    h = jnp.dot(x, w1_ref[...], preferred_element_type=jnp.float32)
    h = jnp.dot(h.astype(jnp.bfloat16), w2_ref[...],
                preferred_element_type=jnp.float32) + b2_ref[...]
    h = jnp.dot(h.astype(jnp.bfloat16), w3_ref[...],
                preferred_element_type=jnp.float32)
    h = jnp.dot(h.astype(jnp.bfloat16), w4_ref[...],
                preferred_element_type=jnp.float32) + b4_ref[...]
    o_ref[...] = h.astype(o_ref.dtype)


def _resident_call(xp, w1p, w2p, b2p, w3p, w4p, b4p, out_dtype, tm,
                   vmem_limit, single_buffer_weights):
    m_p, dim_p = xp.shape
    hid_p = w1p.shape[1]

    def winv(i):
        return (0, 0)

    if single_buffer_weights:
        # Grid-invariant blocks: single-buffer them (double-buffering would
        # only burn VMEM since the block index never changes).
        wspec = lambda s: pl.BlockSpec(s, winv, pipeline_mode=pl.Buffered(1))
    else:
        wspec = lambda s: pl.BlockSpec(s, winv)

    cost = pl.CostEstimate(
        flops=8 * m_p * dim_p * hid_p,
        transcendentals=0,
        bytes_accessed=(8 * dim_p * hid_p                  # bf16 weights
                        + 2 * m_p * dim_p                  # x (bf16)
                        + 8 * dim_p                        # biases (f32)
                        + m_p * dim_p * jnp.dtype(out_dtype).itemsize))

    # TODO(synk): verify 2-TC sharding of the row axis on v7x in a trace;
    # switch to CORE_PARALLEL / core_map if plain "parallel" does not split.
    return pl.pallas_call(
        _mlp_resident_kernel,
        out_shape=jax.ShapeDtypeStruct((m_p, dim_p), out_dtype),
        grid_spec=pltpu.PrefetchScalarGridSpec(
            num_scalar_prefetch=0,
            grid=(m_p // tm,),
            in_specs=[
                pl.BlockSpec((tm, dim_p), lambda i: (i, 0)),     # x row tile
                wspec((dim_p, hid_p)),                           # W1
                wspec((hid_p, dim_p)),                           # W2
                wspec((1, dim_p)),                               # b2
                wspec((dim_p, hid_p)),                           # W3
                wspec((hid_p, dim_p)),                           # W4
                wspec((1, dim_p)),                               # b4
            ],
            out_specs=pl.BlockSpec((tm, dim_p), lambda i: (i, 0)),
        ),
        compiler_params=pltpu.CompilerParams(
            dimension_semantics=("parallel",),
            vmem_limit_bytes=vmem_limit,
        ),
        cost_estimate=cost,
    )(xp, w1p, w2p, b2p, w3p, w4p, b4p)


# ----------------------------------------------------------------------------
# plan B: hidden-dim-tiled streaming (one call per linear pair)
# ----------------------------------------------------------------------------

def _mlp_pair_kernel(x_ref, wa_ref, wb_ref, b_ref, o_ref, acc_ref):
    """out = (x @ Wa) @ Wb + b, reduced over hidden-dim blocks (grid axis 1)."""
    k = pl.program_id(1)

    @pl.when(k == 0)
    def _():
        acc_ref[...] = jnp.zeros_like(acc_ref)

    h = jnp.dot(x_ref[...], wa_ref[...], preferred_element_type=jnp.float32)
    acc_ref[...] += jnp.dot(h.astype(jnp.bfloat16), wb_ref[...],
                            preferred_element_type=jnp.float32)

    @pl.when(k == pl.num_programs(1) - 1)
    def _():
        o_ref[...] = (acc_ref[...] + b_ref[...]).astype(o_ref.dtype)


def _pair_ktiled_call(xp, wa, wb, b, out_dtype, tm, tile_h, vmem_limit):
    m_p, dim_p = xp.shape
    hid_p = wa.shape[1]
    n_k = hid_p // tile_h

    cost = pl.CostEstimate(
        flops=4 * m_p * dim_p * hid_p,
        transcendentals=0,
        bytes_accessed=((m_p // tm) * 4 * dim_p * hid_p    # streamed bf16 weight slices
                        + 2 * m_p * dim_p
                        + m_p * dim_p * jnp.dtype(out_dtype).itemsize))

    return pl.pallas_call(
        _mlp_pair_kernel,
        out_shape=jax.ShapeDtypeStruct((m_p, dim_p), out_dtype),
        grid_spec=pltpu.PrefetchScalarGridSpec(
            num_scalar_prefetch=0,
            grid=(m_p // tm, n_k),
            in_specs=[
                pl.BlockSpec((tm, dim_p), lambda i, k: (i, 0)),      # x row tile
                pl.BlockSpec((dim_p, tile_h), lambda i, k: (0, k)),  # Wa slice
                pl.BlockSpec((tile_h, dim_p), lambda i, k: (k, 0)),  # Wb slice
                pl.BlockSpec((1, dim_p), lambda i, k: (0, 0)),       # bias
            ],
            out_specs=pl.BlockSpec((tm, dim_p), lambda i, k: (i, 0)),
            scratch_shapes=[pltpu.VMEM((tm, dim_p), jnp.float32)],
        ),
        compiler_params=pltpu.CompilerParams(
            dimension_semantics=("parallel", "arbitrary"),
            vmem_limit_bytes=vmem_limit,
        ),
        cost_estimate=cost,
    )(xp, wa, wb, b)


# ----------------------------------------------------------------------------
# public entry points
# ----------------------------------------------------------------------------

@functools.partial(jax.jit, static_argnames=(
    "tile_m", "vmem_budget", "force_ktiled", "single_buffer_weights"))
def mlp_pallas(x2d, w1p, w2p, b2p, w3p, w4p, b4p, *, tile_m=256,
               vmem_budget=96 * 1024 * 1024, force_ktiled=False,
               single_buffer_weights=True):
    """x2d: (M, dim); weights pre-padded/pre-cast by prepare_params()."""
    M, dim = x2d.shape
    dim_p, hid_p = w1p.shape
    out_dtype = x2d.dtype
    out_bytes = jnp.dtype(out_dtype).itemsize

    plan, tm, tile_h = _select_plan(M, dim_p, hid_p, out_bytes, tile_m,
                                    vmem_budget, single_buffer_weights)
    if force_ktiled:
        plan = "ktiled"

    m_p = _round_up(M, tm)
    # Only the activations are padded per call (weights were padded once).
    xp = jnp.pad(x2d.astype(jnp.bfloat16), ((0, m_p - M), (0, dim_p - dim)))

    vmem_limit = int(vmem_budget)
    if plan == "resident":
        out_p = _resident_call(xp, w1p, w2p, b2p, w3p, w4p, b4p, out_dtype,
                               tm, vmem_limit, single_buffer_weights)
    else:
        h = _pair_ktiled_call(xp, w1p, w2p, b2p, jnp.bfloat16, tm, tile_h, vmem_limit)
        out_p = _pair_ktiled_call(h, w3p, w4p, b4p, out_dtype, tm, tile_h, vmem_limit)

    return out_p[:M, :dim]


_single_buffer_weights_supported = [True]


def mlp_forward(x, prepared_params, *, tile_m=256, force_ktiled=False):
    """x: (..., dim) like the PyTorch module; returns the same leading shape."""
    dim = x.shape[-1]
    lead = x.shape[:-1]
    x2d = x.reshape(-1, dim)
    budget = _vmem_budget_bytes()
    kwargs = dict(tile_m=tile_m, vmem_budget=budget, force_ktiled=force_ktiled)
    if _single_buffer_weights_supported[0]:
        try:
            y2d = mlp_pallas(x2d, *prepared_params,
                             single_buffer_weights=True, **kwargs)
            return y2d.reshape(*lead, dim)
        except Exception:
            # pipeline_mode=pl.Buffered(1) support varies across JAX versions;
            # fall back to default (double-buffered) weight specs.
            _single_buffer_weights_supported[0] = False
    y2d = mlp_pallas(x2d, *prepared_params, single_buffer_weights=False, **kwargs)
    return y2d.reshape(*lead, dim)


def prepare_params(params):
    """Pad + cast weights to lane-dense bf16 (biases to f32) ONCE, outside the
    per-call path.  Weights are stored (in, out) = PyTorch W.T; biases (1, out)."""
    w1, w2, b2, w3, w4, b4 = params
    dim, hidden = w1.shape
    dim_p = _align_feature(dim)
    hid_p = _align_feature(hidden)

    def padw(a, rows, cols):
        a = a.astype(jnp.bfloat16)
        return jnp.pad(a, ((0, rows - a.shape[0]), (0, cols - a.shape[1])))

    def padb(a, cols):
        a = jnp.asarray(a).reshape(1, -1).astype(jnp.float32)
        return jnp.pad(a, ((0, 0), (0, cols - a.shape[1])))

    return (padw(w1, dim_p, hid_p), padw(w2, hid_p, dim_p), padb(b2, dim_p),
            padw(w3, dim_p, hid_p), padw(w4, hid_p, dim_p), padb(b4, dim_p))


def init_params(key, dim, mult=16, dtype=jnp.float32):
    """Deterministic init; weights stored as (in, out) = PyTorch W.T."""
    hidden = dim * mult
    k1, k2, k3, k4, k5, k6 = jax.random.split(key, 6)
    w1 = jax.random.normal(k1, (dim, hidden), dtype) * 0.02   # linear1 (no bias)
    w2 = jax.random.normal(k2, (hidden, dim), dtype) * 0.02   # linear2
    b2 = jax.random.normal(k3, (1, dim), dtype) * 0.02
    w3 = jax.random.normal(k4, (dim, hidden), dtype) * 0.02   # linear3 (no bias)
    w4 = jax.random.normal(k5, (hidden, dim), dtype) * 0.02   # linear4
    b4 = jax.random.normal(k6, (1, dim), dtype) * 0.02
    return (w1, w2, b2, w3, w4, b4)


def mlp_reference(x, params):
    """Pure-JAX reference mirroring the kernel's precision contract:
    bf16 operands (weights AND activations/intermediates), f32 accumulation."""
    w1, w2, b2, w3, w4, b4 = params
    bf = lambda a: a.astype(jnp.bfloat16)
    f32 = jnp.float32
    h = jnp.dot(bf(x), bf(w1), preferred_element_type=f32)
    h = jnp.dot(bf(h), bf(w2), preferred_element_type=f32) + b2.reshape(-1).astype(f32)
    h = jnp.dot(bf(h), bf(w3), preferred_element_type=f32)
    h = jnp.dot(bf(h), bf(w4), preferred_element_type=f32) + b4.reshape(-1).astype(f32)
    return h.astype(x.dtype)


if __name__ == "__main__":
    key = jax.random.PRNGKey(0)
    kx, kp = jax.random.split(key)

    dim, mult = 32, 16
    batch, seq = 2, 8
    x = jax.random.normal(kx, (batch, seq, dim), jnp.float32)

    params = init_params(kp, dim, mult)
    prepared = prepare_params(params)

    ref = mlp_reference(x, params)

    # Default plan: weights are small enough to stay fully VMEM-resident.
    out = jax.block_until_ready(mlp_forward(x, prepared))
    assert out.shape == (batch, seq, dim)
    assert jnp.allclose(out, ref, atol=1e-2, rtol=1e-2), "resident path mismatch"

    # Also exercise the hidden-dim-tiled streaming plan (used automatically
    # when the weight set exceeds the VMEM budget, e.g. big dim*mult on v7x).
    out_kt = jax.block_until_ready(mlp_forward(x, prepared, force_ktiled=True))
    assert out_kt.shape == (batch, seq, dim)
    assert jnp.allclose(out_kt, ref, atol=1e-2, rtol=1e-2), "k-tiled path mismatch"

    print("KERNEL_OK")
</pallas_src>

<mosaic_0001>
module attributes {stable_mosaic.version = 11 : i64} {
  func.func @_mlp_resident_kernel(%arg0: i32, %arg1: memref<16x128xbf16, #tpu.memory_space<vmem>>, %arg2: memref<128x512xbf16, #tpu.memory_space<vmem>>, %arg3: memref<512x128xbf16, #tpu.memory_space<vmem>>, %arg4: memref<1x128xf32, #tpu.memory_space<vmem>>, %arg5: memref<128x512xbf16, #tpu.memory_space<vmem>>, %arg6: memref<512x128xbf16, #tpu.memory_space<vmem>>, %arg7: memref<1x128xf32, #tpu.memory_space<vmem>>, %arg8: memref<16x128xf32, #tpu.memory_space<vmem>>) attributes {dimension_semantics = [#tpu.dimension_semantics<parallel>], iteration_bounds = array<i64: 1>, scalar_prefetch = 0 : i64, scratch_operands = 0 : i64, tpu.core_type = #tpu.core_type<tc>, window_params = [{transform_indices = @transform_0, window_bounds = array<i64: 16, 128>}, {pipeline_mode = #tpu.pipeline_mode<synchronous>, transform_indices = @transform_1, window_bounds = array<i64: 128, 512>}, {pipeline_mode = #tpu.pipeline_mode<synchronous>, transform_indices = @transform_2, window_bounds = array<i64: 512, 128>}, {pipeline_mode = #tpu.pipeline_mode<synchronous>, transform_indices = @transform_3, window_bounds = array<i64: 1, 128>}, {pipeline_mode = #tpu.pipeline_mode<synchronous>, transform_indices = @transform_4, window_bounds = array<i64: 128, 512>}, {pipeline_mode = #tpu.pipeline_mode<synchronous>, transform_indices = @transform_5, window_bounds = array<i64: 512, 128>}, {pipeline_mode = #tpu.pipeline_mode<synchronous>, transform_indices = @transform_6, window_bounds = array<i64: 1, 128>}, {transform_indices = @transform_7, window_bounds = array<i64: 16, 128>}]} {
    %c0 = arith.constant 0 : index
    %c0_0 = arith.constant 0 : index
    %0 = vector.load %arg1[%c0, %c0_0] : memref<16x128xbf16, #tpu.memory_space<vmem>>, vector<16x128xbf16>
    %c0_1 = arith.constant 0 : index
    %c0_2 = arith.constant 0 : index
    %1 = vector.load %arg2[%c0_1, %c0_2] : memref<128x512xbf16, #tpu.memory_space<vmem>>, vector<128x512xbf16>
    %cst = arith.constant dense<0.000000e+00> : vector<16x512xf32>
    %2 = tpu.matmul %0, %1, %cst {dimension_numbers = #tpu.dot_dimension_numbers<[1], [0], [0], [1], [0, 0, 1, 1], [], []>} : vector<16x128xbf16>, vector<128x512xbf16>, vector<16x512xf32> -> vector<16x512xf32>
    %3 = arith.truncf %2 : vector<16x512xf32> to vector<16x512xbf16>
    %c0_3 = arith.constant 0 : index
    %c0_4 = arith.constant 0 : index
    %4 = vector.load %arg3[%c0_3, %c0_4] : memref<512x128xbf16, #tpu.memory_space<vmem>>, vector<512x128xbf16>
    %cst_5 = arith.constant dense<0.000000e+00> : vector<16x128xf32>
    %5 = tpu.matmul %3, %4, %cst_5 {dimension_numbers = #tpu.dot_dimension_numbers<[1], [0], [0], [1], [0, 0, 1, 1], [], []>} : vector<16x512xbf16>, vector<512x128xbf16>, vector<16x128xf32> -> vector<16x128xf32>
    %c0_6 = arith.constant 0 : index
    %c0_7 = arith.constant 0 : index
    %6 = vector.load %arg4[%c0_6, %c0_7] : memref<1x128xf32, #tpu.memory_space<vmem>>, vector<1x128xf32>
    %7 = vector.broadcast %6 : vector<1x128xf32> to vector<16x128xf32>
    %8 = arith.addf %5, %7 : vector<16x128xf32>
    %9 = arith.truncf %8 : vector<16x128xf32> to vector<16x128xbf16>
    %c0_8 = arith.constant 0 : index
    %c0_9 = arith.constant 0 : index
    %10 = vector.load %arg5[%c0_8, %c0_9] : memref<128x512xbf16, #tpu.memory_space<vmem>>, vector<128x512xbf16>
    %cst_10 = arith.constant dense<0.000000e+00> : vector<16x512xf32>
    %11 = tpu.matmul %9, %10, %cst_10 {dimension_numbers = #tpu.dot_dimension_numbers<[1], [0], [0], [1], [0, 0, 1, 1], [], []>} : vector<16x128xbf16>, vector<128x512xbf16>, vector<16x512xf32> -> vector<16x512xf32>
    %12 = arith.truncf %11 : vector<16x512xf32> to vector<16x512xbf16>
    %c0_11 = arith.constant 0 : index
    %c0_12 = arith.constant 0 : index
    %13 = vector.load %arg6[%c0_11, %c0_12] : memref<512x128xbf16, #tpu.memory_space<vmem>>, vector<512x128xbf16>
    %cst_13 = arith.constant dense<0.000000e+00> : vector<16x128xf32>
    %14 = tpu.matmul %12, %13, %cst_13 {dimension_numbers = #tpu.dot_dimension_numbers<[1], [0], [0], [1], [0, 0, 1, 1], [], []>} : vector<16x512xbf16>, vector<512x128xbf16>, vector<16x128xf32> -> vector<16x128xf32>
    %c0_14 = arith.constant 0 : index
    %c0_15 = arith.constant 0 : index
    %15 = vector.load %arg7[%c0_14, %c0_15] : memref<1x128xf32, #tpu.memory_space<vmem>>, vector<1x128xf32>
    %16 = vector.broadcast %15 : vector<1x128xf32> to vector<16x128xf32>
    %17 = arith.addf %14, %16 : vector<16x128xf32>
    %c0_16 = arith.constant 0 : index
    %c0_17 = arith.constant 0 : index
    %18 = vector.load %arg8[%c0_16, %c0_17] : memref<16x128xf32, #tpu.memory_space<vmem>>, vector<16x128xf32>
    tpu.vector_store %arg8[%c0_16, %c0_17], %17 {strides = array<i32>} : memref<16x128xf32, #tpu.memory_space<vmem>>, vector<16x128xf32>,
    return
  }
  func.func @transform_0(%arg0: i32) -> (i32, i32) {
    %c0_i32 = arith.constant 0 : i32
    %c0_i32_0 = arith.constant 0 : i32
    return %arg0, %c0_i32 : i32, i32
  }
  func.func @transform_1(%arg0: i32) -> (i32, i32) {
    %c0_i32 = arith.constant 0 : i32
    %c0_i32_0 = arith.constant 0 : i32
    %c0_i32_1 = arith.constant 0 : i32
    return %c0_i32, %c0_i32_0 : i32, i32
  }
  func.func @transform_2(%arg0: i32) -> (i32, i32) {
    %c0_i32 = arith.constant 0 : i32
    %c0_i32_0 = arith.constant 0 : i32
    %c0_i32_1 = arith.constant 0 : i32
    return %c0_i32, %c0_i32_0 : i32, i32
  }
  func.func @transform_3(%arg0: i32) -> (i32, i32) {
    %c0_i32 = arith.constant 0 : i32
    %c0_i32_0 = arith.constant 0 : i32
    %c0_i32_1 = arith.constant 0 : i32
    return %c0_i32, %c0_i32_0 : i32, i32
  }
  func.func @transform_4(%arg0: i32) -> (i32, i32) {
    %c0_i32 = arith.constant 0 : i32
    %c0_i32_0 = arith.constant 0 : i32
    %c0_i32_1 = arith.constant 0 : i32
    return %c0_i32, %c0_i32_0 : i32, i32
  }
  func.func @transform_5(%arg0: i32) -> (i32, i32) {
    %c0_i32 = arith.constant 0 : i32
    %c0_i32_0 = arith.constant 0 : i32
    %c0_i32_1 = arith.constant 0 : i32
    return %c0_i32, %c0_i32_0 : i32, i32
  }
  func.func @transform_6(%arg0: i32) -> (i32, i32) {
    %c0_i32 = arith.constant 0 : i32
    %c0_i32_0 = arith.constant 0 : i32
    %c0_i32_1 = arith.constant 0 : i32
    return %c0_i32, %c0_i32_0 : i32, i32
  }
  func.func @transform_7(%arg0: i32) -> (i32, i32) {
    %c0_i32 = arith.constant 0 : i32
    %c0_i32_0 = arith.constant 0 : i32
    return %arg0, %c0_i32 : i32, i32
  }
}

module attributes {stable_mosaic.version = 11 : i64} {
  func.func @_mlp_resident_kernel(%arg0: i32, %arg1: memref<16x128xbf16, #tpu.memory_space<vmem>>, %arg2: memref<128x512xbf16, #tpu.memory_space<vmem>>, %arg3: memref<512x128xbf16, #tpu.memory_space<vmem>>, %arg4: memref<1x128xf32, #tpu.memory_space<vmem>>, %arg5: memref<128x512xbf16, #tpu.memory_space<vmem>>, %arg6: memref<512x128xbf16, #tpu.memory_space<vmem>>, %arg7: memref<1x128xf32, #tpu.memory_space<vmem>>, %arg8: memref<16x128xf32, #tpu.memory_space<vmem>>) attributes {dimension_semantics = [#tpu.dimension_semantics<parallel>], iteration_bounds = array<i64: 1>, scalar_prefetch = 0 : i64, scratch_operands = 0 : i64, tpu.core_type = #tpu.core_type<tc>, window_params = [{transform_indices = @transform_0, window_bounds = array<i64: 16, 128>}, {pipeline_mode = #tpu.pipeline_mode<synchronous>, transform_indices = @transform_1, window_bounds = array<i64: 128, 512>}, {pipeline_mode = #tpu.pipeline_mode<synchronous>, transform_indices = @transform_2, window_bounds = array<i64: 512, 128>}, {pipeline_mode = #tpu.pipeline_mode<synchronous>, transform_indices = @transform_3, window_bounds = array<i64: 1, 128>}, {pipeline_mode = #tpu.pipeline_mode<synchronous>, transform_indices = @transform_4, window_bounds = array<i64: 128, 512>}, {pipeline_mode = #tpu.pipeline_mode<synchronous>, transform_indices = @transform_5, window_bounds = array<i64: 512, 128>}, {pipeline_mode = #tpu.pipeline_mode<synchronous>, transform_indices = @transform_6, window_bounds = array<i64: 1, 128>}, {transform_indices = @transform_7, window_bounds = array<i64: 16, 128>}]} {
    %c0 = arith.constant 0 : index
    %c0_0 = arith.constant 0 : index
    %0 = vector.load %arg1[%c0, %c0_0] : memref<16x128xbf16, #tpu.memory_space<vmem>>, vector<16x128xbf16>
    %c0_1 = arith.constant 0 : index
    %c0_2 = arith.constant 0 : index
    %1 = vector.load %arg2[%c0_1, %c0_2] : memref<128x512xbf16, #tpu.memory_space<vmem>>, vector<128x512xbf16>
    %cst = arith.constant dense<0.000000e+00> : vector<16x512xf32>
    %2 = tpu.matmul %0, %1, %cst {dimension_numbers = #tpu.dot_dimension_numbers<[1], [0], [0], [1], [0, 0, 1, 1], [], []>} : vector<16x128xbf16>, vector<128x512xbf16>, vector<16x512xf32> -> vector<16x512xf32>
    %3 = arith.truncf %2 : vector<16x512xf32> to vector<16x512xbf16>
    %c0_3 = arith.constant 0 : index
    %c0_4 = arith.constant 0 : index
    %4 = vector.load %arg3[%c0_3, %c0_4] : memref<512x128xbf16, #tpu.memory_space<vmem>>, vector<512x128xbf16>
    %cst_5 = arith.constant dense<0.000000e+00> : vector<16x128xf32>
    %5 = tpu.matmul %3, %4, %cst_5 {dimension_numbers = #tpu.dot_dimension_numbers<[1], [0], [0], [1], [0, 0, 1, 1], [], []>} : vector<16x512xbf16>, vector<512x128xbf16>, vector<16x128xf32> -> vector<16x128xf32>
    %c0_6 = arith.constant 0 : index
    %c0_7 = arith.constant 0 : index
    %6 = vector.load %arg4[%c0_6, %c0_7] : memref<1x128xf32, #tpu.memory_space<vmem>>, vector<1x128xf32>
    %7 = vector.broadcast %6 : vector<1x128xf32> to vector<16x128xf32>
    %8 = arith.addf %5, %7 : vector<16x128xf32>
    %9 = arith.truncf %8 : vector<16x128xf32> to vector<16x128xbf16>
    %c0_8 = arith.constant 0 : index
    %c0_9 = arith.constant 0 : index
    %10 = vector.load %arg5[%c0_8, %c0_9] : memref<128x512xbf16, #tpu.memory_space<vmem>>, vector<128x512xbf16>
    %cst_10 = arith.constant dense<0.000000e+00> : vector<16x512xf32>
    %11 = tpu.matmul %9, %10, %cst_10 {dimension_numbers = #tpu.dot_dimension_numbers<[1], [0], [0], [1], [0, 0, 1, 1], [], []>} : vector<16x128xbf16>, vector<128x512xbf16>, vector<16x512xf32> -> vector<16x512xf32>
    %12 = arith.truncf %11 : vector<16x512xf32> to vector<16x512xbf16>
    %c0_11 = arith.constant 0 : index
    %c0_12 = arith.constant 0 : index
    %13 = vector.load %arg6[%c0_11, %c0_12] : memref<512x128xbf16, #tpu.memory_space<vmem>>, vector<512x128xbf16>
    %cst_13 = arith.constant dense<0.000000e+00> : vector<16x128xf32>
    %14 = tpu.matmul %12, %13, %cst_13 {dimension_numbers = #tpu.dot_dimension_numbers<[1], [0], [0], [1], [0, 0, 1, 1], [], []>} : vector<16x512xbf16>, vector<512x128xbf16>, vector<16x128xf32> -> vector<16x128xf32>
    %c0_14 = arith.constant 0 : index
    %c0_15 = arith.constant 0 : index
    %15 = vector.load %arg7[%c0_14, %c0_15] : memref<1x128xf32, #tpu.memory_space<vmem>>, vector<1x128xf32>
    %16 = vector.broadcast %15 : vector<1x128xf32> to vector<16x128xf32>
    %17 = arith.addf %14, %16 : vector<16x128xf32>
    %c0_16 = arith.constant 0 : index
    %c0_17 = arith.constant 0 : index
    %18 = vector.load %arg8[%c0_16, %c0_17] : memref<16x128xf32, #tpu.memory_space<vmem>>, vector<16x128xf32>
    tpu.vector_store %arg8[%c0_16, %c0_17], %17 {strides = array<i32>} : memref<16x128xf32, #tpu.memory_space<vmem>>, vector<16x128xf32>,
    return
  }
  func.func @transform_0(%arg0: i32) -> (i32, i32) {
    %c0_i32 = arith.constant 0 : i32
    %c0_i32_0 = arith.constant 0 : i32
    return %arg0, %c0_i32 : i32, i32
  }
  func.func @transform_1(%arg0: i32) -> (i32, i32) {
    %c0_i32 = arith.constant 0 : i32
    %c0_i32_0 = arith.constant 0 : i32
    %c0_i32_1 = arith.constant 0 : i32
    return %c0_i32, %c0_i32_0 : i32, i32
  }
  func.func @transform_2(%arg0: i32) -> (i32, i32) {
    %c0_i32 = arith.constant 0 : i32
    %c0_i32_0 = arith.constant 0 : i32
    %c0_i32_1 = arith.constant 0 : i32
    return %c0_i32, %c0_i32_0 : i32, i32
  }
  func.func @transform_3(%arg0: i32) -> (i32, i32) {
    %c0_i32 = arith.constant 0 : i32
    %c0_i32_0 = arith.constant 0 : i32
    %c0_i32_1 = arith.constant 0 : i32
    return %c0_i32, %c0_i32_0 : i32, i32
  }
  func.func @transform_4(%arg0: i32) -> (i32, i32) {
    %c0_i32 = arith.constant 0 : i32
    %c0_i32_0 = arith.constant 0 : i32
    %c0_i32_1 = arith.constant 0 : i32
    return %c0_i32, %c0_i32_0 : i32, i32
  }
  func.func @transform_5(%arg0: i32) -> (i32, i32) {
    %c0_i32 = arith.constant 0 : i32
    %c0_i32_0 = arith.constant 0 : i32
    %c0_i32_1 = arith.constant 0 : i32
    return %c0_i32, %c0_i32_0 : i32, i32
  }
  func.func @transform_6(%arg0: i32) -> (i32, i32) {
    %c0_i32 = arith.constant 0 : i32
    %c0_i32_0 = arith.constant 0 : i32
    %c0_i32_1 = arith.constant 0 : i32
    return %c0_i32, %c0_i32_0 : i32, i32
  }
  func.func @transform_7(%arg0: i32) -> (i32, i32) {
    %c0_i32 = arith.constant 0 : i32
    %c0_i32_0 = arith.constant 0 : i32
    return %arg0, %c0_i32 : i32, i32
  }
}

</mosaic_0001>

<llo_original>
// kernel: mlp_pallas.1
$region0: #{mlp_pallas.1}
  #allocation0 [shape = 'u32[]', space=smem, size = 0x4, offset = 0x4, fixed_abs, tag = 'smem constant byte address 0x4 - core index']
  #allocation1 [shape = 'u32[144,128]{1,0:T(1,128)}', space=vmem, size = 0x12000, scoped, tag = 'internal scratch']
  %s0 = inlined_call_operand.hbm [shape: bf16[16,128], index: 0, kind: input, shape index: {}]
  %s1 = inlined_call_operand.hbm [shape: bf16[128,512], index: 1, kind: input, shape index: {}]
  %s2 = inlined_call_operand.hbm [shape: bf16[512,128], index: 2, kind: input, shape index: {}]
  %s3 = inlined_call_operand.hbm [shape: f32[1,128], index: 3, kind: input, shape index: {}]
  %s4 = inlined_call_operand.hbm [shape: bf16[128,512], index: 4, kind: input, shape index: {}]
  %s5 = inlined_call_operand.hbm [shape: bf16[512,128], index: 5, kind: input, shape index: {}]
  %s6 = inlined_call_operand.hbm [shape: f32[1,128], index: 6, kind: input, shape index: {}]
  %s7 = inlined_call_operand.hbm [shape: f32[16,128], index: 7, kind: output, shape index: {}]
  %s8 = sld [smem:[#allocation0]]
  $region66: #{mlp_pallas.1} parent=0
    _
  %s10 = ssub.s32 1, %s8
  %s11 = scalar_select 0, %s10, %s8
  $region1: #{mlp_pallas.1} parent=0
    #allocation2 [shape = 'u8[4096]{0}', space=vmem, size = 0x1000, scoped, tag = 'input window, operand 0, single buffered']
    #allocation3 [shape = 's32[1]{0}', space=sflag, size = 0x4, scoped, tag = 'scoped memory for mlp_pallas.1']
    #allocation4 [shape = 's32[1]{0}', space=sflag, size = 0x4, scoped, tag = 'scoped memory for mlp_pallas.1']
    #allocation5 [shape = 'u8[131072]{0}', space=vmem, size = 0x20000, scoped, tag = 'input window, operand 1, single buffered']
    #allocation6 [shape = 's32[1]{0}', space=sflag, size = 0x4, scoped, tag = 'scoped memory for mlp_pallas.1']
    #allocation7 [shape = 'u8[131072]{0}', space=vmem, size = 0x20000, scoped, tag = 'input window, operand 2, single buffered']
    #allocation8 [shape = 'u8[512]{0}', space=vmem, size = 0x400, scoped, tag = 'input window, operand 3, single buffered']
    #allocation9 [shape = 's32[1]{0}', space=sflag, size = 0x4, scoped, tag = 'scoped memory for mlp_pallas.1']
    #allocation10 [shape = 'u8[131072]{0}', space=vmem, size = 0x20000, scoped, tag = 'input window, operand 4, single buffered']
    #allocation11 [shape = 'u8[131072]{0}', space=vmem, size = 0x20000, scoped, tag = 'input window, operand 5, single buffered']
    #allocation12 [shape = 's32[1]{0}', space=sflag, size = 0x4, scoped, tag = 'scoped memory for mlp_pallas.1']
    #allocation13 [shape = 'u8[512]{0}', space=vmem, size = 0x400, scoped, tag = 'input window, operand 6, single buffered']
    #allocation14 [shape = 'u8[8192]{0}', space=vmem, size = 0x2000, scoped, tag = 'output window, operand 0, single buffered']
    %12 = vsyncpa [#allocation3], 0
    %13 = vsyncpa [#allocation6], 0
    %14 = vsyncpa [#allocation9], 0
    %15 = vsyncpa [#allocation12], 0
    %16 = vsyncpa [#allocation4], 0
    // Predicated region
    $region2: #{mlp_pallas.1} parent=1 // pred_check
      _
    $region3: #{mlp_pallas.1} parent=1 // pred_check_branch
      %18 = sbr.rel (0) target = $region5
    $region4: #{mlp_pallas.1} parent=1 // pred_region
      %s20 = ssub.s32 128, 128
      %21 = vsyncadd [#allocation3], %s20
      %s22 = sshll.u32 [#allocation2], 4
      %s23 = int_to_ptr.vmem [resolvable:$true] %s22
      %28 = dma.hbm_to_vmem [thread:$0]  %s0, 128, %s23, [#allocation3], 64, 64, 4
    $region5: #{mlp_pallas.1} parent=1 // pred_fallthru
      _
    // Predicated region
    $region6: #{mlp_pallas.1} parent=1 // pred_check
      _
    $region7: #{mlp_pallas.1} parent=1 // pred_check_branch
      %30 = sbr.rel (0) target = $region9
    $region8: #{mlp_pallas.1} parent=1 // pred_region
      %s32 = ssub.s32 4096, 4096
      %33 = vsyncadd [#allocation6], %s32
      %s34 = sshll.u32 [#allocation5], 4
      %s35 = int_to_ptr.vmem [resolvable:$true] %s34
      %40 = dma.hbm_to_vmem [thread:$0]  %s1, 4096, %s35, [#allocation6], 256, 256, 16
    $region9: #{mlp_pallas.1} parent=1 // pred_fallthru
      _
    // Predicated region
    $region10: #{mlp_pallas.1} parent=1 // pred_check
      _
    $region11: #{mlp_pallas.1} parent=1 // pred_check_branch
      %42 = sbr.rel (0) target = $region13
    $region12: #{mlp_pallas.1} parent=1 // pred_region
      %s44 = ssub.s32 4096, 4096
      %45 = vsyncadd [#allocation6], %s44
      %s46 = sshll.u32 [#allocation7], 4
      %s47 = int_to_ptr.vmem [resolvable:$true] %s46
      %52 = dma.hbm_to_vmem [thread:$0]  %s2, 4096, %s47, [#allocation6], 64, 64, 4
    $region13: #{mlp_pallas.1} parent=1 // pred_fallthru
      _
    // Predicated region
    $region14: #{mlp_pallas.1} parent=1 // pred_check
      _
    $region15: #{mlp_pallas.1} parent=1 // pred_check_branch
      %54 = sbr.rel (0) target = $region17
    $region16: #{mlp_pallas.1} parent=1 // pred_region
      %s56 = ssub.s32 16, 16
      %57 = vsyncadd [#allocation9], %s56
      %s59 = sshll.u32 [#allocation8], 4
      %s60 = int_to_ptr.vmem [resolvable:$true] %s59
      %62 = dma.hbm_to_vmem [thread:$0]  %s3, 16, %s60, [#allocation9]
    $region17: #{mlp_pallas.1} parent=1 // pred_fallthru
      _
    // Predicated region
    $region18: #{mlp_pallas.1} parent=1 // pred_check
      _
    $region19: #{mlp_pallas.1} parent=1 // pred_check_branch
      %64 = sbr.rel (0) target = $region21
    $region20: #{mlp_pallas.1} parent=1 // pred_region
      %s66 = ssub.s32 4096, 4096
      %67 = vsyncadd [#allocation9], %s66
      %s68 = sshll.u32 [#allocation10], 4
      %s69 = int_to_ptr.vmem [resolvable:$true] %s68
      %74 = dma.hbm_to_vmem [thread:$0]  %s4, 4096, %s69, [#allocation9], 256, 256, 16
    $region21: #{mlp_pallas.1} parent=1 // pred_fallthru
      _
    // Predicated region
    $region22: #{mlp_pallas.1} parent=1 // pred_check
      _
    $region23: #{mlp_pallas.1} parent=1 // pred_check_branch
      %76 = sbr.rel (0) target = $region25
    $region24: #{mlp_pallas.1} parent=1 // pred_region
      %s78 = ssub.s32 4096, 4096
      %79 = vsyncadd [#allocation12], %s78
      %s80 = sshll.u32 [#allocation11], 4
      %s81 = int_to_ptr.vmem [resolvable:$true] %s80
      %86 = dma.hbm_to_vmem [thread:$0]  %s5, 4096, %s81, [#allocation12], 64, 64, 4
    $region25: #{mlp_pallas.1} parent=1 // pred_fallthru
      _
    // Predicated region
    $region26: #{mlp_pallas.1} parent=1 // pred_check
      _
    $region27: #{mlp_pallas.1} parent=1 // pred_check_branch
      %88 = sbr.rel (0) target = $region29
    $region28: #{mlp_pallas.1} parent=1 // pred_region
      %s90 = ssub.s32 16, 16
      %91 = vsyncadd [#allocation12], %s90
      %s93 = sshll.u32 [#allocation13], 4
      %s94 = int_to_ptr.vmem [resolvable:$true] %s93
      %96 = dma.hbm_to_vmem [thread:$0]  %s6, 16, %s94, [#allocation12]
    $region29: #{mlp_pallas.1} parent=1 // pred_fallthru
      _
    // Predicated region
    $region30: #{mlp_pallas.1} parent=1 // pred_check
      _
    $region31: #{mlp_pallas.1} parent=1 // pred_check_branch
      %98 = sbr.rel (0) target = $region33
    $region32: #{mlp_pallas.1} parent=1 // pred_region
      %99 = dma.done [#allocation3], 128
    $region33: #{mlp_pallas.1} parent=1 // pred_fallthru
      _
    // Predicated region
    $region34: #{mlp_pallas.1} parent=1 // pred_check
      _
    $region35: #{mlp_pallas.1} parent=1 // pred_check_branch
      %101 = sbr.rel (0) target = $region37
    $region36: #{mlp_pallas.1} parent=1 // pred_region
      %102 = dma.done [#allocation6], 4096
    $region37: #{mlp_pallas.1} parent=1 // pred_fallthru
      _
    // Predicated region
    $region38: #{mlp_pallas.1} parent=1 // pred_check
      _
    $region39: #{mlp_pallas.1} parent=1 // pred_check_branch
      %104 = sbr.rel (0) target = $region41
    $region40: #{mlp_pallas.1} parent=1 // pred_region
      %105 = dma.done [#allocation6], 4096
    $region41: #{mlp_pallas.1} parent=1 // pred_fallthru
      _
    // Predicated region
    $region42: #{mlp_pallas.1} parent=1 // pred_check
      _
    $region43: #{mlp_pallas.1} parent=1 // pred_check_branch
      %107 = sbr.rel (0) target = $region45
    $region44: #{mlp_pallas.1} parent=1 // pred_region
      %108 = dma.done [#allocation9], 16
    $region45: #{mlp_pallas.1} parent=1 // pred_fallthru
      _
    // Predicated region
    $region46: #{mlp_pallas.1} parent=1 // pred_check
      _
    $region47: #{mlp_pallas.1} parent=1 // pred_check_branch
      %110 = sbr.rel (0) target = $region49
    $region48: #{mlp_pallas.1} parent=1 // pred_region
      %111 = dma.done [#allocation9], 4096
    $region49: #{mlp_pallas.1} parent=1 // pred_fallthru
      _
    // Predicated region
    $region50: #{mlp_pallas.1} parent=1 // pred_check
      _
    $region51: #{mlp_pallas.1} parent=1 // pred_check_branch
      %113 = sbr.rel (0) target = $region53
    $region52: #{mlp_pallas.1} parent=1 // pred_region
      %114 = dma.done [#allocation12], 4096
    $region53: #{mlp_pallas.1} parent=1 // pred_fallthru
      _
    // Predicated region
    $region54: #{mlp_pallas.1} parent=1 // pred_check
      _
    $region55: #{mlp_pallas.1} parent=1 // pred_check_branch
      %116 = sbr.rel (0) target = $region57
    $region56: #{mlp_pallas.1} parent=1 // pred_region
      %117 = dma.done [#allocation12], 16
    $region57: #{mlp_pallas.1} parent=1 // pred_fallthru
      _
    %v119 = vld [vmem:[#allocation2] sm:$0xf]
    %v120 = vld [vmem:[#allocation2 + $0x4] sm:$0xf]
    %v121 = vld [vmem:[#allocation5] sm:$0xff]
    %v122 = vld [vmem:[#allocation5 + $0x8] sm:$0xff]
    %v123 = vld [vmem:[#allocation5 + $0x10] sm:$0xff]
    %v124 = vld [vmem:[#allocation5 + $0x18] sm:$0xff]
    %v125 = vld [vmem:[#allocation5 + $0x20] sm:$0xff]
    %v126 = vld [vmem:[#allocation5 + $0x28] sm:$0xff]
    %v127 = vld [vmem:[#allocation5 + $0x30] sm:$0xff]
    %v128 = vld [vmem:[#allocation5 + $0x38] sm:$0xff]
    %v129 = vld [vmem:[#allocation5 + $0x40] sm:$0xff]
    %v130 = vld [vmem:[#allocation5 + $0x48] sm:$0xff]
    %v131 = vld [vmem:[#allocation5 + $0x50] sm:$0xff]
    %v132 = vld [vmem:[#allocation5 + $0x58] sm:$0xff]
    %v133 = vld [vmem:[#allocation5 + $0x60] sm:$0xff]
    %v134 = vld [vmem:[#allocation5 + $0x68] sm:$0xff]
    %v135 = vld [vmem:[#allocation5 + $0x70] sm:$0xff]
    %v136 = vld [vmem:[#allocation5 + $0x78] sm:$0xff]
    %v137 = vld [vmem:[#allocation5 + $0x80] sm:$0xff]
    %v138 = vld [vmem:[#allocation5 + $0x88] sm:$0xff]
    %v139 = vld [vmem:[#allocation5 + $0x90] sm:$0xff]
    %v140 = vld [vmem:[#allocation5 + $0x98] sm:$0xff]
    %v141 = vld [vmem:[#allocation5 + $0xa0] sm:$0xff]
    %v142 = vld [vmem:[#allocation5 + $0xa8] sm:$0xff]
    %v143 = vld [vmem:[#allocation5 + $0xb0] sm:$0xff]
    %v144 = vld [vmem:[#allocation5 + $0xb8] sm:$0xff]
    %v145 = vld [vmem:[#allocation5 + $0xc0] sm:$0xff]
    %v146 = vld [vmem:[#allocation5 + $0xc8] sm:$0xff]
    %v147 = vld [vmem:[#allocation5 + $0xd0] sm:$0xff]
    %v148 = vld [vmem:[#allocation5 + $0xd8] sm:$0xff]
    %v149 = vld [vmem:[#allocation5 + $0xe0] sm:$0xff]
    %v150 = vld [vmem:[#allocation5 + $0xe8] sm:$0xff]
    %v151 = vld [vmem:[#allocation5 + $0xf0] sm:$0xff]
    %v152 = vld [vmem:[#allocation5 + $0xf8] sm:$0xff]
    %v155 = vunpack.c.l.b16 %v119
    %v156 = vunpack.c.l.b16 %v120
    %v157 = vpack.c.b16 %v156, %v155
    %v191 = vunpack.c.l.b16 %v121
    %v192 = vunpack.c.h.b16 %v121
    %v193 = vunpack.c.l.b16 %v122
    %v194 = vunpack.c.h.b16 %v122
    %v195 = vunpack.c.l.b16 %v123
    %v196 = vunpack.c.h.b16 %v123
    %v197 = vunpack.c.l.b16 %v124
    %v198 = vunpack.c.h.b16 %v124
    %v199 = vunpack.c.l.b16 %v125
    %v200 = vunpack.c.h.b16 %v125
    %v201 = vunpack.c.l.b16 %v126
    %v202 = vunpack.c.h.b16 %v126
    %v203 = vunpack.c.l.b16 %v127
    %v204 = vunpack.c.h.b16 %v127
    %v205 = vunpack.c.l.b16 %v128
    %v206 = vunpack.c.h.b16 %v128
    %v207 = vunpack.c.l.b16 %v129
    %v208 = vunpack.c.h.b16 %v129
    %v209 = vunpack.c.l.b16 %v130
    %v210 = vunpack.c.h.b16 %v130
    %v211 = vunpack.c.l.b16 %v131
    %v212 = vunpack.c.h.b16 %v131
    %v213 = vunpack.c.l.b16 %v132
    %v214 = vunpack.c.h.b16 %v132
    %v215 = vunpack.c.l.b16 %v133
    %v216 = vunpack.c.h.b16 %v133
    %v217 = vunpack.c.l.b16 %v134
    %v218 = vunpack.c.h.b16 %v134
    %v219 = vunpack.c.l.b16 %v135
    %v220 = vunpack.c.h.b16 %v135
    %v221 = vunpack.c.l.b16 %v136
    %v222 = vunpack.c.h.b16 %v136
    %v223 = vunpack.c.l.b16 %v137
    %v224 = vunpack.c.h.b16 %v137
    %v225 = vunpack.c.l.b16 %v138
    %v226 = vunpack.c.h.b16 %v138
    %v227 = vunpack.c.l.b16 %v139
    %v228 = vunpack.c.h.b16 %v139
    %v229 = vunpack.c.l.b16 %v140
    %v230 = vunpack.c.h.b16 %v140
    %v231 = vunpack.c.l.b16 %v141
    %v232 = vunpack.c.h.b16 %v141
    %v233 = vunpack.c.l.b16 %v142
    %v234 = vunpack.c.h.b16 %v142
    %v235 = vunpack.c.l.b16 %v143
    %v236 = vunpack.c.h.b16 %v143
    %v237 = vunpack.c.l.b16 %v144
    %v238 = vunpack.c.h.b16 %v144
    %v239 = vunpack.c.l.b16 %v145
    %v240 = vunpack.c.h.b16 %v145
    %v241 = vunpack.c.l.b16 %v146
    %v242 = vunpack.c.h.b16 %v146
    %v243 = vunpack.c.l.b16 %v147
    %v244 = vunpack.c.h.b16 %v147
    %v245 = vunpack.c.l.b16 %v148
    %v246 = vunpack.c.h.b16 %v148
    %v247 = vunpack.c.l.b16 %v149
    %v248 = vunpack.c.h.b16 %v149
    %v249 = vunpack.c.l.b16 %v150
    %v250 = vunpack.c.h.b16 %v150
    %v251 = vunpack.c.l.b16 %v151
    %v252 = vunpack.c.h.b16 %v151
    %v253 = vunpack.c.l.b16 %v152
    %v254 = vunpack.c.h.b16 %v152
    %v255 = vpack.c.b16 %v195, %v191
    %v256 = vpack.c.b16 %v196, %v192
    %v257 = vpack.c.b16 %v197, %v193
    %v258 = vpack.c.b16 %v198, %v194
    %v259 = vpack.c.b16 %v203, %v199
    %v260 = vpack.c.b16 %v204, %v200
    %v261 = vpack.c.b16 %v205, %v201
    %v262 = vpack.c.b16 %v206, %v202
    %v263 = vpack.c.b16 %v211, %v207
    %v264 = vpack.c.b16 %v212, %v208
    %v265 = vpack.c.b16 %v213, %v209
    %v266 = vpack.c.b16 %v214, %v210
    %v267 = vpack.c.b16 %v219, %v215
    %v268 = vpack.c.b16 %v220, %v216
    %v269 = vpack.c.b16 %v221, %v217
    %v270 = vpack.c.b16 %v222, %v218
    %v271 = vpack.c.b16 %v227, %v223
    %v272 = vpack.c.b16 %v228, %v224
    %v273 = vpack.c.b16 %v229, %v225
    %v274 = vpack.c.b16 %v230, %v226
    %v275 = vpack.c.b16 %v235, %v231
    %v276 = vpack.c.b16 %v236, %v232
    %v277 = vpack.c.b16 %v237, %v233
    %v278 = vpack.c.b16 %v238, %v234
    %v279 = vpack.c.b16 %v243, %v239
    %v280 = vpack.c.b16 %v244, %v240
    %v281 = vpack.c.b16 %v245, %v241
    %v282 = vpack.c.b16 %v246, %v242
    %v283 = vpack.c.b16 %v251, %v247
    %v284 = vpack.c.b16 %v252, %v248
    %v285 = vpack.c.b16 %v253, %v249
    %v286 = vpack.c.b16 %v254, %v250
    %319 = vmatprep.subr.bf16.mxu0 %v256
    %320 = vmatpush1.bf16.msra.mxu0 %v255
    %321 = vmatprep.subr.bf16.mxu0 %v260
    %322 = vmatpush1.bf16.msra.mxu0 %v259
    %323 = vmatprep.subr.bf16.mxu0 %v264
    %324 = vmatpush1.bf16.msra.mxu0 %v263
    %325 = vmatprep.subr.bf16.mxu0 %v268
    %326 = vmatpush1.bf16.msra.mxu0 %v267
    %327 = vmatprep.subr.bf16.mxu0 %v272
    %328 = vmatpush1.bf16.msra.mxu0 %v271
    %329 = vmatprep.subr.bf16.mxu0 %v276
    %330 = vmatpush1.bf16.msra.mxu0 %v275
    %331 = vmatprep.subr.bf16.mxu0 %v280
    %332 = vmatpush1.bf16.msra.mxu0 %v279
    %333 = vmatprep.subr.bf16.mxu0 %v284
    %334 = vmatpush1.bf16.msra.mxu0 %v283
    %335 = vmatprep.subr.bf16.mxu0 0
    %336 = vmatpush1.bf16.msra.mxu0 0
    %337 = vmatprep.subr.bf16.mxu0 0
    %338 = vmatpush1.bf16.msra.mxu0 0
    %339 = vmatprep.subr.bf16.mxu0 0
    %340 = vmatpush1.bf16.msra.mxu0 0
    %341 = vmatprep.subr.bf16.mxu0 0
    %342 = vmatpush1.bf16.msra.mxu0 0
    %343 = vmatprep.subr.bf16.mxu0 0
    %344 = vmatpush1.bf16.msra.mxu0 0
    %345 = vmatprep.subr.bf16.mxu0 0
    %346 = vmatpush1.bf16.msra.mxu0 0
    %347 = vmatprep.subr.bf16.mxu0 0
    %348 = vmatpush1.bf16.msra.mxu0 0
    %349 = vmatprep.subr.bf16.mxu0 0
    %350 = vmatpush1.bf16.msra.mxu0 0
    %351 = vmatprep.mubr.bf16.mxu0 0
    %352 = vmatmul.mubr.bf16.gmra.mrb[0].mxu0 %v157
    %v353 = vpop.f32.mrb[0].mxu0
    %v354 = vadd.f32 0.0, %v353
    %v355 = vpop.f32.mrb[0].mxu0
    %v356 = vadd.f32 0.0, %v355
    %v357 = vpop.f32.mrb[0].mxu0
    %v358 = vadd.f32 0.0, %v357
    %v359 = vpop.f32.mrb[0].mxu0
    %v360 = vadd.f32 0.0, %v359
    %361 = vdwg.mxu0
    %362 = vmatprep.subr.bf16.mxu0 %v258
    %363 = vmatpush1.bf16.msra.mxu0 %v257
    %364 = vmatprep.subr.bf16.mxu0 %v262
    %365 = vmatpush1.bf16.msra.mxu0 %v261
    %366 = vmatprep.subr.bf16.mxu0 %v266
    %367 = vmatpush1.bf16.msra.mxu0 %v265
    %368 = vmatprep.subr.bf16.mxu0 %v270
    %369 = vmatpush1.bf16.msra.mxu0 %v269
    %370 = vmatprep.subr.bf16.mxu0 %v274
    %371 = vmatpush1.bf16.msra.mxu0 %v273
    %372 = vmatprep.subr.bf16.mxu0 %v278
    %373 = vmatpush1.bf16.msra.mxu0 %v277
    %374 = vmatprep.subr.bf16.mxu0 %v282
    %375 = vmatpush1.bf16.msra.mxu0 %v281
    %376 = vmatprep.subr.bf16.mxu0 %v286
    %377 = vmatpush1.bf16.msra.mxu0 %v285
    %378 = vmatprep.subr.bf16.mxu0 0
    %379 = vmatpush1.bf16.msra.mxu0 0
    %380 = vmatprep.subr.bf16.mxu0 0
    %381 = vmatpush1.bf16.msra.mxu0 0
    %382 = vmatprep.subr.bf16.mxu0 0
    %383 = vmatpush1.bf16.msra.mxu0 0
    %384 = vmatprep.subr.bf16.mxu0 0
    %385 = vmatpush1.bf16.msra.mxu0 0
    %386 = vmatprep.subr.bf16.mxu0 0
    %387 = vmatpush1.bf16.msra.mxu0 0
    %388 = vmatprep.subr.bf16.mxu0 0
    %389 = vmatpush1.bf16.msra.mxu0 0
    %390 = vmatprep.subr.bf16.mxu0 0
    %391 = vmatpush1.bf16.msra.mxu0 0
    %392 = vmatprep.subr.bf16.mxu0 0
    %393 = vmatpush1.bf16.msra.mxu0 0
    %394 = vmatprep.mubr.bf16.mxu0 0
    %395 = vmatmul.mubr.bf16.gmra.mrb[0].mxu0 %v157
    %v396 = vpop.f32.mrb[0].mxu0
    %v397 = vadd.f32 0.0, %v396
    %v398 = vpop.f32.mrb[0].mxu0
    %v399 = vadd.f32 0.0, %v398
    %v400 = vpop.f32.mrb[0].mxu0
    %v401 = vadd.f32 0.0, %v400
    %v402 = vpop.f32.mrb[0].mxu0
    %v403 = vadd.f32 0.0, %v402
    %404 = vdwg.mxu0
    %v405 = vpack.c.bf16 %v358, %v354
    %v406 = vpack.c.bf16 %v360, %v356
    %v407 = vpack.c.bf16 %v401, %v397
    %v408 = vpack.c.bf16 %v403, %v399
    %v409 = vld [vmem:[#allocation7] sm:$0xf]
    %v410 = vld [vmem:[#allocation7 + $0x4] sm:$0xf]
    %v411 = vld [vmem:[#allocation7 + $0x8] sm:$0xf]
    %v412 = vld [vmem:[#allocation7 + $0xc] sm:$0xf]
    %v413 = vld [vmem:[#allocation7 + $0x10] sm:$0xf]
    %v414 = vld [vmem:[#allocation7 + $0x14] sm:$0xf]
    %v415 = vld [vmem:[#allocation7 + $0x18] sm:$0xf]
    %v416 = vld [vmem:[#allocation7 + $0x1c] sm:$0xf]
    %v417 = vld [vmem:[#allocation7 + $0x20] sm:$0xf]
    %v418 = vld [vmem:[#allocation7 + $0x24] sm:$0xf]
    %v419 = vld [vmem:[#allocation7 + $0x28] sm:$0xf]
    %v420 = vld [vmem:[#allocation7 + $0x2c] sm:$0xf]
    %v421 = vld [vmem:[#allocation7 + $0x30] sm:$0xf]
    %v422 = vld [vmem:[#allocation7 + $0x34] sm:$0xf]
    %v423 = vld [vmem:[#allocation7 + $0x38] sm:$0xf]
    %v424 = vld [vmem:[#allocation7 + $0x3c] sm:$0xf]
    %v425 = vld [vmem:[#allocation7 + $0x40] sm:$0xf]
    %v426 = vld [vmem:[#allocation7 + $0x44] sm:$0xf]
    %v427 = vld [vmem:[#allocation7 + $0x48] sm:$0xf]
    %v428 = vld [vmem:[#allocation7 + $0x4c] sm:$0xf]
    %v429 = vld [vmem:[#allocation7 + $0x50] sm:$0xf]
    %v430 = vld [vmem:[#allocation7 + $0x54] sm:$0xf]
    %v431 = vld [vmem:[#allocation7 + $0x58] sm:$0xf]
    %v432 = vld [vmem:[#allocation7 + $0x5c] sm:$0xf]
    %v433 = vld [vmem:[#allocation7 + $0x60] sm:$0xf]
    %v434 = vld [vmem:[#allocation7 + $0x64] sm:$0xf]
    %v435 = vld [vmem:[#allocation7 + $0x68] sm:$0xf]
    %v436 = vld [vmem:[#allocation7 + $0x6c] sm:$0xf]
    %v437 = vld [vmem:[#allocation7 + $0x70] sm:$0xf]
    %v438 = vld [vmem:[#allocation7 + $0x74] sm:$0xf]
    %v439 = vld [vmem:[#allocation7 + $0x78] sm:$0xf]
    %v440 = vld [vmem:[#allocation7 + $0x7c] sm:$0xf]
    %v441 = vld [vmem:[#allocation7 + $0x80] sm:$0xf]
    %v442 = vld [vmem:[#allocation7 + $0x84] sm:$0xf]
    %v443 = vld [vmem:[#allocation7 + $0x88] sm:$0xf]
    %v444 = vld [vmem:[#allocation7 + $0x8c] sm:$0xf]
    %v445 = vld [vmem:[#allocation7 + $0x90] sm:$0xf]
    %v446 = vld [vmem:[#allocation7 + $0x94] sm:$0xf]
    %v447 = vld [vmem:[#allocation7 + $0x98] sm:$0xf]
    %v448 = vld [vmem:[#allocation7 + $0x9c] sm:$0xf]
    %v449 = vld [vmem:[#allocation7 + $0xa0] sm:$0xf]
    %v450 = vld [vmem:[#allocation7 + $0xa4] sm:$0xf]
    %v451 = vld [vmem:[#allocation7 + $0xa8] sm:$0xf]
    %v452 = vld [vmem:[#allocation7 + $0xac] sm:$0xf]
    %v453 = vld [vmem:[#allocation7 + $0xb0] sm:$0xf]
    %v454 = vld [vmem:[#allocation7 + $0xb4] sm:$0xf]
    %v455 = vld [vmem:[#allocation7 + $0xb8] sm:$0xf]
    %v456 = vld [vmem:[#allocation7 + $0xbc] sm:$0xf]
    %v457 = vld [vmem:[#allocation7 + $0xc0] sm:$0xf]
    %v458 = vld [vmem:[#allocation7 + $0xc4] sm:$0xf]
    %v459 = vld [vmem:[#allocation7 + $0xc8] sm:$0xf]
    %v460 = vld [vmem:[#allocation7 + $0xcc] sm:$0xf]
    %v461 = vld [vmem:[#allocation7 + $0xd0] sm:$0xf]
    %v462 = vld [vmem:[#allocation7 + $0xd4] sm:$0xf]
    %v463 = vld [vmem:[#allocation7 + $0xd8] sm:$0xf]
    %v464 = vld [vmem:[#allocation7 + $0xdc] sm:$0xf]
    %v465 = vld [vmem:[#allocation7 + $0xe0] sm:$0xf]
    %v466 = vld [vmem:[#allocation7 + $0xe4] sm:$0xf]
    %v467 = vld [vmem:[#allocation7 + $0xe8] sm:$0xf]
    %v468 = vld [vmem:[#allocation7 + $0xec] sm:$0xf]
    %v469 = vld [vmem:[#allocation7 + $0xf0] sm:$0xf]
    %v470 = vld [vmem:[#allocation7 + $0xf4] sm:$0xf]
    %v471 = vld [vmem:[#allocation7 + $0xf8] sm:$0xf]
    %v472 = vld [vmem:[#allocation7 + $0xfc] sm:$0xf]
    %v473 = vld [vmem:[#allocation8] sm:$0x1]
    %v475 = vlaneseq
    %v476 = vshrl.u32 %v475, 7
    %v477 = vsub.s32 0, %v476
    %v478 = vrot.slane %v473, %v477
    %v544 = vunpack.c.l.b16 %v409
    %v545 = vunpack.c.l.b16 %v410
    %v546 = vunpack.c.l.b16 %v411
    %v547 = vunpack.c.l.b16 %v412
    %v548 = vunpack.c.l.b16 %v413
    %v549 = vunpack.c.l.b16 %v414
    %v550 = vunpack.c.l.b16 %v415
    %v551 = vunpack.c.l.b16 %v416
    %v552 = vunpack.c.l.b16 %v417
    %v553 = vunpack.c.l.b16 %v418
    %v554 = vunpack.c.l.b16 %v419
    %v555 = vunpack.c.l.b16 %v420
    %v556 = vunpack.c.l.b16 %v421
    %v557 = vunpack.c.l.b16 %v422
    %v558 = vunpack.c.l.b16 %v423
    %v559 = vunpack.c.l.b16 %v424
    %v560 = vunpack.c.l.b16 %v425
    %v561 = vunpack.c.l.b16 %v426
    %v562 = vunpack.c.l.b16 %v427
    %v563 = vunpack.c.l.b16 %v428
    %v564 = vunpack.c.l.b16 %v429
    %v565 = vunpack.c.l.b16 %v430
    %v566 = vunpack.c.l.b16 %v431
    %v567 = vunpack.c.l.b16 %v432
    %v568 = vunpack.c.l.b16 %v433
    %v569 = vunpack.c.l.b16 %v434
    %v570 = vunpack.c.l.b16 %v435
    %v571 = vunpack.c.l.b16 %v436
    %v572 = vunpack.c.l.b16 %v437
    %v573 = vunpack.c.l.b16 %v438
    %v574 = vunpack.c.l.b16 %v439
    %v575 = vunpack.c.l.b16 %v440
    %v576 = vunpack.c.l.b16 %v441
    %v577 = vunpack.c.l.b16 %v442
    %v578 = vunpack.c.l.b16 %v443
    %v579 = vunpack.c.l.b16 %v444
    %v580 = vunpack.c.l.b16 %v445
    %v581 = vunpack.c.l.b16 %v446
    %v582 = vunpack.c.l.b16 %v447
    %v583 = vunpack.c.l.b16 %v448
    %v584 = vunpack.c.l.b16 %v449
    %v585 = vunpack.c.l.b16 %v450
    %v586 = vunpack.c.l.b16 %v451
    %v587 = vunpack.c.l.b16 %v452
    %v588 = vunpack.c.l.b16 %v453
    %v589 = vunpack.c.l.b16 %v454
    %v590 = vunpack.c.l.b16 %v455
    %v591 = vunpack.c.l.b16 %v456
    %v592 = vunpack.c.l.b16 %v457
    %v593 = vunpack.c.l.b16 %v458
    %v594 = vunpack.c.l.b16 %v459
    %v595 = vunpack.c.l.b16 %v460
    %v596 = vunpack.c.l.b16 %v461
    %v597 = vunpack.c.l.b16 %v462
    %v598 = vunpack.c.l.b16 %v463
    %v599 = vunpack.c.l.b16 %v464
    %v600 = vunpack.c.l.b16 %v465
    %v601 = vunpack.c.l.b16 %v466
    %v602 = vunpack.c.l.b16 %v467
    %v603 = vunpack.c.l.b16 %v468
    %v604 = vunpack.c.l.b16 %v469
    %v605 = vunpack.c.l.b16 %v470
    %v606 = vunpack.c.l.b16 %v471
    %v607 = vunpack.c.l.b16 %v472
    %v608 = vpack.c.b16 %v545, %v544
    %v609 = vpack.c.b16 %v547, %v546
    %v610 = vpack.c.b16 %v549, %v548
    %v611 = vpack.c.b16 %v551, %v550
    %v612 = vpack.c.b16 %v553, %v552
    %v613 = vpack.c.b16 %v555, %v554
    %v614 = vpack.c.b16 %v557, %v556
    %v615 = vpack.c.b16 %v559, %v558
    %v616 = vpack.c.b16 %v561, %v560
    %v617 = vpack.c.b16 %v563, %v562
    %v618 = vpack.c.b16 %v565, %v564
    %v619 = vpack.c.b16 %v567, %v566
    %v620 = vpack.c.b16 %v569, %v568
    %v621 = vpack.c.b16 %v571, %v570
    %v622 = vpack.c.b16 %v573, %v572
    %v623 = vpack.c.b16 %v575, %v574
    %v624 = vpack.c.b16 %v577, %v576
    %v625 = vpack.c.b16 %v579, %v578
    %v626 = vpack.c.b16 %v581, %v580
    %v627 = vpack.c.b16 %v583, %v582
    %v628 = vpack.c.b16 %v585, %v584
    %v629 = vpack.c.b16 %v587, %v586
    %v630 = vpack.c.b16 %v589, %v588
    %v631 = vpack.c.b16 %v591, %v590
    %v632 = vpack.c.b16 %v593, %v592
    %v633 = vpack.c.b16 %v595, %v594
    %v634 = vpack.c.b16 %v597, %v596
    %v635 = vpack.c.b16 %v599, %v598
    %v636 = vpack.c.b16 %v601, %v600
    %v637 = vpack.c.b16 %v603, %v602
    %v638 = vpack.c.b16 %v605, %v604
    %v639 = vpack.c.b16 %v607, %v606
    %672 = vmatprep.subr.bf16.mxu0 0
    %673 = vmatpush1.bf16.msra.mxu0 %v608
    %674 = vmatprep.subr.bf16.mxu0 0
    %675 = vmatpush1.bf16.msra.mxu0 %v609
    %676 = vmatprep.subr.bf16.mxu0 0
    %677 = vmatpush1.bf16.msra.mxu0 %v610
    %678 = vmatprep.subr.bf16.mxu0 0
    %679 = vmatpush1.bf16.msra.mxu0 %v611
    %680 = vmatprep.subr.bf16.mxu0 0
    %681 = vmatpush1.bf16.msra.mxu0 %v612
    %682 = vmatprep.subr.bf16.mxu0 0
    %683 = vmatpush1.bf16.msra.mxu0 %v613
    %684 = vmatprep.subr.bf16.mxu0 0
    %685 = vmatpush1.bf16.msra.mxu0 %v614
    %686 = vmatprep.subr.bf16.mxu0 0
    %687 = vmatpush1.bf16.msra.mxu0 %v615
    %688 = vmatprep.subr.bf16.mxu0 0
    %689 = vmatpush1.bf16.msra.mxu0 %v616
    %690 = vmatprep.subr.bf16.mxu0 0
    %691 = vmatpush1.bf16.msra.mxu0 %v617
    %692 = vmatprep.subr.bf16.mxu0 0
    %693 = vmatpush1.bf16.msra.mxu0 %v618
    %694 = vmatprep.subr.bf16.mxu0 0
    %695 = vmatpush1.bf16.msra.mxu0 %v619
    %696 = vmatprep.subr.bf16.mxu0 0
    %697 = vmatpush1.bf16.msra.mxu0 %v620
    %698 = vmatprep.subr.bf16.mxu0 0
    %699 = vmatpush1.bf16.msra.mxu0 %v621
    %700 = vmatprep.subr.bf16.mxu0 0
    %701 = vmatpush1.bf16.msra.mxu0 %v622
    %702 = vmatprep.subr.bf16.mxu0 0
    %703 = vmatpush1.bf16.msra.mxu0 %v623
    %704 = vmatprep.mubr.bf16.mxu0 %v406
    %705 = vmatmul.mubr.bf16.gmra.mrb[0].mxu0 %v405
    %v706 = vpop.f32.mrb[0].mxu0
    %v707 = vadd.f32 %v478, %v706
    %v708 = vpop.f32.mrb[0].mxu0
    %v709 = vpop.f32.mrb[0].mxu0
    %v710 = vadd.f32 %v478, %v709
    %v711 = vpop.f32.mrb[0].mxu0
    %712 = vdwg.mxu0
    %713 = vmatprep.subr.bf16.mxu0 0
    %714 = vmatpush1.bf16.msra.mxu0 %v624
    %715 = vmatprep.subr.bf16.mxu0 0
    %716 = vmatpush1.bf16.msra.mxu0 %v625
    %717 = vmatprep.subr.bf16.mxu0 0
    %718 = vmatpush1.bf16.msra.mxu0 %v626
    %719 = vmatprep.subr.bf16.mxu0 0
    %720 = vmatpush1.bf16.msra.mxu0 %v627
    %721 = vmatprep.subr.bf16.mxu0 0
    %722 = vmatpush1.bf16.msra.mxu0 %v628
    %723 = vmatprep.subr.bf16.mxu0 0
    %724 = vmatpush1.bf16.msra.mxu0 %v629
    %725 = vmatprep.subr.bf16.mxu0 0
    %726 = vmatpush1.bf16.msra.mxu0 %v630
    %727 = vmatprep.subr.bf16.mxu0 0
    %728 = vmatpush1.bf16.msra.mxu0 %v631
    %729 = vmatprep.subr.bf16.mxu0 0
    %730 = vmatpush1.bf16.msra.mxu0 %v632
    %731 = vmatprep.subr.bf16.mxu0 0
    %732 = vmatpush1.bf16.msra.mxu0 %v633
    %733 = vmatprep.subr.bf16.mxu0 0
    %734 = vmatpush1.bf16.msra.mxu0 %v634
    %735 = vmatprep.subr.bf16.mxu0 0
    %736 = vmatpush1.bf16.msra.mxu0 %v635
    %737 = vmatprep.subr.bf16.mxu0 0
    %738 = vmatpush1.bf16.msra.mxu0 %v636
    %739 = vmatprep.subr.bf16.mxu0 0
    %740 = vmatpush1.bf16.msra.mxu0 %v637
    %741 = vmatprep.subr.bf16.mxu0 0
    %742 = vmatpush1.bf16.msra.mxu0 %v638
    %743 = vmatprep.subr.bf16.mxu0 0
    %744 = vmatpush1.bf16.msra.mxu0 %v639
    %745 = vmatprep.mubr.bf16.mxu0 %v408
    %746 = vmatmul.mubr.bf16.gmra.mrb[0].mxu0 %v407
    %v747 = vpop.f32.mrb[0].mxu0
    %v748 = vadd.f32 %v707, %v747
    %v749 = vpop.f32.mrb[0].mxu0
    %v750 = vpop.f32.mrb[0].mxu0
    %v751 = vadd.f32 %v710, %v750
    %v752 = vpop.f32.mrb[0].mxu0
    %753 = vdwg.mxu0
    %v754 = vpack.c.bf16 %v751, %v748
    %v755 = vld [vmem:[#allocation10] sm:$0xff]
    %v756 = vld [vmem:[#allocation10 + $0x8] sm:$0xff]
    %v757 = vld [vmem:[#allocation10 + $0x10] sm:$0xff]
    %v758 = vld [vmem:[#allocation10 + $0x18] sm:$0xff]
    %v759 = vld [vmem:[#allocation10 + $0x20] sm:$0xff]
    %v760 = vld [vmem:[#allocation10 + $0x28] sm:$0xff]
    %v761 = vld [vmem:[#allocation10 + $0x30] sm:$0xff]
    %v762 = vld [vmem:[#allocation10 + $0x38] sm:$0xff]
    %v763 = vld [vmem:[#allocation10 + $0x40] sm:$0xff]
    %v764 = vld [vmem:[#allocation10 + $0x48] sm:$0xff]
    %v765 = vld [vmem:[#allocation10 + $0x50] sm:$0xff]
    %v766 = vld [vmem:[#allocation10 + $0x58] sm:$0xff]
    %v767 = vld [vmem:[#allocation10 + $0x60] sm:$0xff]
    %v768 = vld [vmem:[#allocation10 + $0x68] sm:$0xff]
    %v769 = vld [vmem:[#allocation10 + $0x70] sm:$0xff]
    %v770 = vld [vmem:[#allocation10 + $0x78] sm:$0xff]
    %v771 = vld [vmem:[#allocation10 + $0x80] sm:$0xff]
    %v772 = vld [vmem:[#allocation10 + $0x88] sm:$0xff]
    %v773 = vld [vmem:[#allocation10 + $0x90] sm:$0xff]
    %v774 = vld [vmem:[#allocation10 + $0x98] sm:$0xff]
    %v775 = vld [vmem:[#allocation10 + $0xa0] sm:$0xff]
    %v776 = vld [vmem:[#allocation10 + $0xa8] sm:$0xff]
    %v777 = vld [vmem:[#allocation10 + $0xb0] sm:$0xff]
    %v778 = vld [vmem:[#allocation10 + $0xb8] sm:$0xff]
    %v779 = vld [vmem:[#allocation10 + $0xc0] sm:$0xff]
    %v780 = vld [vmem:[#allocation10 + $0xc8] sm:$0xff]
    %v781 = vld [vmem:[#allocation10 + $0xd0] sm:$0xff]
    %v782 = vld [vmem:[#allocation10 + $0xd8] sm:$0xff]
    %v783 = vld [vmem:[#allocation10 + $0xe0] sm:$0xff]
    %v784 = vld [vmem:[#allocation10 + $0xe8] sm:$0xff]
    %v785 = vld [vmem:[#allocation10 + $0xf0] sm:$0xff]
    %v786 = vld [vmem:[#allocation10 + $0xf8] sm:$0xff]
    %v819 = vunpack.c.l.b16 %v755
    %v820 = vunpack.c.h.b16 %v755
    %v821 = vunpack.c.l.b16 %v756
    %v822 = vunpack.c.h.b16 %v756
    %v823 = vunpack.c.l.b16 %v757
    %v824 = vunpack.c.h.b16 %v757
    %v825 = vunpack.c.l.b16 %v758
    %v826 = vunpack.c.h.b16 %v758
    %v827 = vunpack.c.l.b16 %v759
    %v828 = vunpack.c.h.b16 %v759
    %v829 = vunpack.c.l.b16 %v760
    %v830 = vunpack.c.h.b16 %v760
    %v831 = vunpack.c.l.b16 %v761
    %v832 = vunpack.c.h.b16 %v761
    %v833 = vunpack.c.l.b16 %v762
    %v834 = vunpack.c.h.b16 %v762
    %v835 = vunpack.c.l.b16 %v763
    %v836 = vunpack.c.h.b16 %v763
    %v837 = vunpack.c.l.b16 %v764
    %v838 = vunpack.c.h.b16 %v764
    %v839 = vunpack.c.l.b16 %v765
    %v840 = vunpack.c.h.b16 %v765
    %v841 = vunpack.c.l.b16 %v766
    %v842 = vunpack.c.h.b16 %v766
    %v843 = vunpack.c.l.b16 %v767
    %v844 = vunpack.c.h.b16 %v767
    %v845 = vunpack.c.l.b16 %v768
    %v846 = vunpack.c.h.b16 %v768
    %v847 = vunpack.c.l.b16 %v769
    %v848 = vunpack.c.h.b16 %v769
    %v849 = vunpack.c.l.b16 %v770
    %v850 = vunpack.c.h.b16 %v770
    %v851 = vunpack.c.l.b16 %v771
    %v852 = vunpack.c.h.b16 %v771
    %v853 = vunpack.c.l.b16 %v772
    %v854 = vunpack.c.h.b16 %v772
    %v855 = vunpack.c.l.b16 %v773
    %v856 = vunpack.c.h.b16 %v773
    %v857 = vunpack.c.l.b16 %v774
    %v858 = vunpack.c.h.b16 %v774
    %v859 = vunpack.c.l.b16 %v775
    %v860 = vunpack.c.h.b16 %v775
    %v861 = vunpack.c.l.b16 %v776
    %v862 = vunpack.c.h.b16 %v776
    %v863 = vunpack.c.l.b16 %v777
    %v864 = vunpack.c.h.b16 %v777
    %v865 = vunpack.c.l.b16 %v778
    %v866 = vunpack.c.h.b16 %v778
    %v867 = vunpack.c.l.b16 %v779
    %v868 = vunpack.c.h.b16 %v779
    %v869 = vunpack.c.l.b16 %v780
    %v870 = vunpack.c.h.b16 %v780
    %v871 = vunpack.c.l.b16 %v781
    %v872 = vunpack.c.h.b16 %v781
    %v873 = vunpack.c.l.b16 %v782
    %v874 = vunpack.c.h.b16 %v782
    %v875 = vunpack.c.l.b16 %v783
    %v876 = vunpack.c.h.b16 %v783
    %v877 = vunpack.c.l.b16 %v784
    %v878 = vunpack.c.h.b16 %v784
    %v879 = vunpack.c.l.b16 %v785
    %v880 = vunpack.c.h.b16 %v785
    %v881 = vunpack.c.l.b16 %v786
    %v882 = vunpack.c.h.b16 %v786
    %v883 = vpack.c.b16 %v823, %v819
    %v884 = vpack.c.b16 %v824, %v820
    %v885 = vpack.c.b16 %v825, %v821
    %v886 = vpack.c.b16 %v826, %v822
    %v887 = vpack.c.b16 %v831, %v827
    %v888 = vpack.c.b16 %v832, %v828
    %v889 = vpack.c.b16 %v833, %v829
    %v890 = vpack.c.b16 %v834, %v830
    %v891 = vpack.c.b16 %v839, %v835
    %v892 = vpack.c.b16 %v840, %v836
    %v893 = vpack.c.b16 %v841, %v837
    %v894 = vpack.c.b16 %v842, %v838
    %v895 = vpack.c.b16 %v847, %v843
    %v896 = vpack.c.b16 %v848, %v844
    %v897 = vpack.c.b16 %v849, %v845
    %v898 = vpack.c.b16 %v850, %v846
    %v899 = vpack.c.b16 %v855, %v851
    %v900 = vpack.c.b16 %v856, %v852
    %v901 = vpack.c.b16 %v857, %v853
    %v902 = vpack.c.b16 %v858, %v854
    %v903 = vpack.c.b16 %v863, %v859
    %v904 = vpack.c.b16 %v864, %v860
    %v905 = vpack.c.b16 %v865, %v861
    %v906 = vpack.c.b16 %v866, %v862
    %v907 = vpack.c.b16 %v871, %v867
    %v908 = vpack.c.b16 %v872, %v868
    %v909 = vpack.c.b16 %v873, %v869
    %v910 = vpack.c.b16 %v874, %v870
    %v911 = vpack.c.b16 %v879, %v875
    %v912 = vpack.c.b16 %v880, %v876
    %v913 = vpack.c.b16 %v881, %v877
    %v914 = vpack.c.b16 %v882, %v878
    %947 = vmatprep.subr.bf16.mxu0 %v884
    %948 = vmatpush1.bf16.msra.mxu0 %v883
    %949 = vmatprep.subr.bf16.mxu0 %v888
    %950 = vmatpush1.bf16.msra.mxu0 %v887
    %951 = vmatprep.subr.bf16.mxu0 %v892
    %952 = vmatpush1.bf16.msra.mxu0 %v891
    %953 = vmatprep.subr.bf16.mxu0 %v896
    %954 = vmatpush1.bf16.msra.mxu0 %v895
    %955 = vmatprep.subr.bf16.mxu0 %v900
    %956 = vmatpush1.bf16.msra.mxu0 %v899
    %957 = vmatprep.subr.bf16.mxu0 %v904
    %958 = vmatpush1.bf16.msra.mxu0 %v903
    %959 = vmatprep.subr.bf16.mxu0 %v908
    %960 = vmatpush1.bf16.msra.mxu0 %v907
    %961 = vmatprep.subr.bf16.mxu0 %v912
    %962 = vmatpush1.bf16.msra.mxu0 %v911
    %963 = vmatprep.subr.bf16.mxu0 0
    %964 = vmatpush1.bf16.msra.mxu0 0
    %965 = vmatprep.subr.bf16.mxu0 0
    %966 = vmatpush1.bf16.msra.mxu0 0
    %967 = vmatprep.subr.bf16.mxu0 0
    %968 = vmatpush1.bf16.msra.mxu0 0
    %969 = vmatprep.subr.bf16.mxu0 0
    %970 = vmatpush1.bf16.msra.mxu0 0
    %971 = vmatprep.subr.bf16.mxu0 0
    %972 = vmatpush1.bf16.msra.mxu0 0
    %973 = vmatprep.subr.bf16.mxu0 0
    %974 = vmatpush1.bf16.msra.mxu0 0
    %975 = vmatprep.subr.bf16.mxu0 0
    %976 = vmatpush1.bf16.msra.mxu0 0
    %977 = vmatprep.subr.bf16.mxu0 0
    %978 = vmatpush1.bf16.msra.mxu0 0
    %979 = vmatprep.mubr.bf16.mxu0 0
    %980 = vmatmul.mubr.bf16.gmra.mrb[0].mxu0 %v754
    %v981 = vpop.f32.mrb[0].mxu0
    %v982 = vadd.f32 0.0, %v981
    %v983 = vpop.f32.mrb[0].mxu0
    %v984 = vadd.f32 0.0, %v983
    %v985 = vpop.f32.mrb[0].mxu0
    %v986 = vadd.f32 0.0, %v985
    %v987 = vpop.f32.mrb[0].mxu0
    %v988 = vadd.f32 0.0, %v987
    %989 = vdwg.mxu0
    %990 = vmatprep.subr.bf16.mxu0 %v886
    %991 = vmatpush1.bf16.msra.mxu0 %v885
    %992 = vmatprep.subr.bf16.mxu0 %v890
    %993 = vmatpush1.bf16.msra.mxu0 %v889
    %994 = vmatprep.subr.bf16.mxu0 %v894
    %995 = vmatpush1.bf16.msra.mxu0 %v893
    %996 = vmatprep.subr.bf16.mxu0 %v898
    %997 = vmatpush1.bf16.msra.mxu0 %v897
    %998 = vmatprep.subr.bf16.mxu0 %v902
    %999 = vmatpush1.bf16.msra.mxu0 %v901
    %1000 = vmatprep.subr.bf16.mxu0 %v906
    %1001 = vmatpush1.bf16.msra.mxu0 %v905
    %1002 = vmatprep.subr.bf16.mxu0 %v910
    %1003 = vmatpush1.bf16.msra.mxu0 %v909
    %1004 = vmatprep.subr.bf16.mxu0 %v914
    %1005 = vmatpush1.bf16.msra.mxu0 %v913
    %1006 = vmatprep.subr.bf16.mxu0 0
    %1007 = vmatpush1.bf16.msra.mxu0 0
    %1008 = vmatprep.subr.bf16.mxu0 0
    %1009 = vmatpush1.bf16.msra.mxu0 0
    %1010 = vmatprep.subr.bf16.mxu0 0
    %1011 = vmatpush1.bf16.msra.mxu0 0
    %1012 = vmatprep.subr.bf16.mxu0 0
    %1013 = vmatpush1.bf16.msra.mxu0 0
    %1014 = vmatprep.subr.bf16.mxu0 0
    %1015 = vmatpush1.bf16.msra.mxu0 0
    %1016 = vmatprep.subr.bf16.mxu0 0
    %1017 = vmatpush1.bf16.msra.mxu0 0
    %1018 = vmatprep.subr.bf16.mxu0 0
    %1019 = vmatpush1.bf16.msra.mxu0 0
    %1020 = vmatprep.subr.bf16.mxu0 0
    %1021 = vmatpush1.bf16.msra.mxu0 0
    %1022 = vmatprep.mubr.bf16.mxu0 0
    %1023 = vmatmul.mubr.bf16.gmra.mrb[0].mxu0 %v754
    %v1024 = vpop.f32.mrb[0].mxu0
    %v1025 = vadd.f32 0.0, %v1024
    %v1026 = vpop.f32.mrb[0].mxu0
    %v1027 = vadd.f32 0.0, %v1026
    %v1028 = vpop.f32.mrb[0].mxu0
    %v1029 = vadd.f32 0.0, %v1028
    %v1030 = vpop.f32.mrb[0].mxu0
    %v1031 = vadd.f32 0.0, %v1030
    %1032 = vdwg.mxu0
    %v1033 = vpack.c.bf16 %v986, %v982
    %v1034 = vpack.c.bf16 %v988, %v984
    %v1035 = vpack.c.bf16 %v1029, %v1025
    %v1036 = vpack.c.bf16 %v1031, %v1027
    %v1037 = vld [vmem:[#allocation11] sm:$0xf]
    %v1038 = vld [vmem:[#allocation11 + $0x4] sm:$0xf]
    %v1039 = vld [vmem:[#allocation11 + $0x8] sm:$0xf]
    %v1040 = vld [vmem:[#allocation11 + $0xc] sm:$0xf]
    %v1041 = vld [vmem:[#allocation11 + $0x10] sm:$0xf]
    %v1042 = vld [vmem:[#allocation11 + $0x14] sm:$0xf]
    %v1043 = vld [vmem:[#allocation11 + $0x18] sm:$0xf]
    %v1044 = vld [vmem:[#allocation11 + $0x1c] sm:$0xf]
    %v1045 = vld [vmem:[#allocation11 + $0x20] sm:$0xf]
    %v1046 = vld [vmem:[#allocation11 + $0x24] sm:$0xf]
    %v1047 = vld [vmem:[#allocation11 + $0x28] sm:$0xf]
    %v1048 = vld [vmem:[#allocation11 + $0x2c] sm:$0xf]
    %v1049 = vld [vmem:[#allocation11 + $0x30] sm:$0xf]
    %v1050 = vld [vmem:[#allocation11 + $0x34] sm:$0xf]
    %v1051 = vld [vmem:[#allocation11 + $0x38] sm:$0xf]
    %v1052 = vld [vmem:[#allocation11 + $0x3c] sm:$0xf]
    %v1053 = vld [vmem:[#allocation11 + $0x40] sm:$0xf]
    %v1054 = vld [vmem:[#allocation11 + $0x44] sm:$0xf]
    %v1055 = vld [vmem:[#allocation11 + $0x48] sm:$0xf]
    %v1056 = vld [vmem:[#allocation11 + $0x4c] sm:$0xf]
    %v1057 = vld [vmem:[#allocation11 + $0x50] sm:$0xf]
    %v1058 = vld [vmem:[#allocation11 + $0x54] sm:$0xf]
    %v1059 = vld [vmem:[#allocation11 + $0x58] sm:$0xf]
    %v1060 = vld [vmem:[#allocation11 + $0x5c] sm:$0xf]
    %v1061 = vld [vmem:[#allocation11 + $0x60] sm:$0xf]
    %v1062 = vld [vmem:[#allocation11 + $0x64] sm:$0xf]
    %v1063 = vld [vmem:[#allocation11 + $0x68] sm:$0xf]
    %v1064 = vld [vmem:[#allocation11 + $0x6c] sm:$0xf]
    %v1065 = vld [vmem:[#allocation11 + $0x70] sm:$0xf]
    %v1066 = vld [vmem:[#allocation11 + $0x74] sm:$0xf]
    %v1067 = vld [vmem:[#allocation11 + $0x78] sm:$0xf]
    %v1068 = vld [vmem:[#allocation11 + $0x7c] sm:$0xf]
    %v1069 = vld [vmem:[#allocation11 + $0x80] sm:$0xf]
    %v1070 = vld [vmem:[#allocation11 + $0x84] sm:$0xf]
    %v1071 = vld [vmem:[#allocation11 + $0x88] sm:$0xf]
    %v1072 = vld [vmem:[#allocation11 + $0x8c] sm:$0xf]
    %v1073 = vld [vmem:[#allocation11 + $0x90] sm:$0xf]
    %v1074 = vld [vmem:[#allocation11 + $0x94] sm:$0xf]
    %v1075 = vld [vmem:[#allocation11 + $0x98] sm:$0xf]
    %v1076 = vld [vmem:[#allocation11 + $0x9c] sm:$0xf]
    %v1077 = vld [vmem:[#allocation11 + $0xa0] sm:$0xf]
    %v1078 = vld [vmem:[#allocation11 + $0xa4] sm:$0xf]
    %v1079 = vld [vmem:[#allocation11 + $0xa8] sm:$0xf]
    %v1080 = vld [vmem:[#allocation11 + $0xac] sm:$0xf]
    %v1081 = vld [vmem:[#allocation11 + $0xb0] sm:$0xf]
    %v1082 = vld [vmem:[#allocation11 + $0xb4] sm:$0xf]
    %v1083 = vld [vmem:[#allocation11 + $0xb8] sm:$0xf]
    %v1084 = vld [vmem:[#allocation11 + $0xbc] sm:$0xf]
    %v1085 = vld [vmem:[#allocation11 + $0xc0] sm:$0xf]
    %v1086 = vld [vmem:[#allocation11 + $0xc4] sm:$0xf]
    %v1087 = vld [vmem:[#allocation11 + $0xc8] sm:$0xf]
    %v1088 = vld [vmem:[#allocation11 + $0xcc] sm:$0xf]
    %v1089 = vld [vmem:[#allocation11 + $0xd0] sm:$0xf]
    %v1090 = vld [vmem:[#allocation11 + $0xd4] sm:$0xf]
    %v1091 = vld [vmem:[#allocation11 + $0xd8] sm:$0xf]
    %v1092 = vld [vmem:[#allocation11 + $0xdc] sm:$0xf]
    %v1093 = vld [vmem:[#allocation11 + $0xe0] sm:$0xf]
    %v1094 = vld [vmem:[#allocation11 + $0xe4] sm:$0xf]
    %v1095 = vld [vmem:[#allocation11 + $0xe8] sm:$0xf]
    %v1096 = vld [vmem:[#allocation11 + $0xec] sm:$0xf]
    %v1097 = vld [vmem:[#allocation11 + $0xf0] sm:$0xf]
    %v1098 = vld [vmem:[#allocation11 + $0xf4] sm:$0xf]
    %v1099 = vld [vmem:[#allocation11 + $0xf8] sm:$0xf]
    %v1100 = vld [vmem:[#allocation11 + $0xfc] sm:$0xf]
    %v1101 = vld [vmem:[#allocation13] sm:$0x1]
    %v1103 = vlaneseq
    %v1104 = vshrl.u32 %v1103, 7
    %v1105 = vsub.s32 0, %v1104
    %v1106 = vrot.slane %v1101, %v1105
    %v1172 = vunpack.c.l.b16 %v1037
    %v1173 = vunpack.c.l.b16 %v1038
    %v1174 = vunpack.c.l.b16 %v1039
    %v1175 = vunpack.c.l.b16 %v1040
    %v1176 = vunpack.c.l.b16 %v1041
    %v1177 = vunpack.c.l.b16 %v1042
    %v1178 = vunpack.c.l.b16 %v1043
    %v1179 = vunpack.c.l.b16 %v1044
    %v1180 = vunpack.c.l.b16 %v1045
    %v1181 = vunpack.c.l.b16 %v1046
    %v1182 = vunpack.c.l.b16 %v1047
    %v1183 = vunpack.c.l.b16 %v1048
    %v1184 = vunpack.c.l.b16 %v1049
    %v1185 = vunpack.c.l.b16 %v1050
    %v1186 = vunpack.c.l.b16 %v1051
    %v1187 = vunpack.c.l.b16 %v1052
    %v1188 = vunpack.c.l.b16 %v1053
    %v1189 = vunpack.c.l.b16 %v1054
    %v1190 = vunpack.c.l.b16 %v1055
    %v1191 = vunpack.c.l.b16 %v1056
    %v1192 = vunpack.c.l.b16 %v1057
    %v1193 = vunpack.c.l.b16 %v1058
    %v1194 = vunpack.c.l.b16 %v1059
    %v1195 = vunpack.c.l.b16 %v1060
    %v1196 = vunpack.c.l.b16 %v1061
    %v1197 = vunpack.c.l.b16 %v1062
    %v1198 = vunpack.c.l.b16 %v1063
    %v1199 = vunpack.c.l.b16 %v1064
    %v1200 = vunpack.c.l.b16 %v1065
    %v1201 = vunpack.c.l.b16 %v1066
    %v1202 = vunpack.c.l.b16 %v1067
    %v1203 = vunpack.c.l.b16 %v1068
    %v1204 = vunpack.c.l.b16 %v1069
    %v1205 = vunpack.c.l.b16 %v1070
    %v1206 = vunpack.c.l.b16 %v1071
    %v1207 = vunpack.c.l.b16 %v1072
    %v1208 = vunpack.c.l.b16 %v1073
    %v1209 = vunpack.c.l.b16 %v1074
    %v1210 = vunpack.c.l.b16 %v1075
    %v1211 = vunpack.c.l.b16 %v1076
    %v1212 = vunpack.c.l.b16 %v1077
    %v1213 = vunpack.c.l.b16 %v1078
    %v1214 = vunpack.c.l.b16 %v1079
    %v1215 = vunpack.c.l.b16 %v1080
    %v1216 = vunpack.c.l.b16 %v1081
    %v1217 = vunpack.c.l.b16 %v1082
    %v1218 = vunpack.c.l.b16 %v1083
    %v1219 = vunpack.c.l.b16 %v1084
    %v1220 = vunpack.c.l.b16 %v1085
    %v1221 = vunpack.c.l.b16 %v1086
    %v1222 = vunpack.c.l.b16 %v1087
    %v1223 = vunpack.c.l.b16 %v1088
    %v1224 = vunpack.c.l.b16 %v1089
    %v1225 = vunpack.c.l.b16 %v1090
    %v1226 = vunpack.c.l.b16 %v1091
    %v1227 = vunpack.c.l.b16 %v1092
    %v1228 = vunpack.c.l.b16 %v1093
    %v1229 = vunpack.c.l.b16 %v1094
    %v1230 = vunpack.c.l.b16 %v1095
    %v1231 = vunpack.c.l.b16 %v1096
    %v1232 = vunpack.c.l.b16 %v1097
    %v1233 = vunpack.c.l.b16 %v1098
    %v1234 = vunpack.c.l.b16 %v1099
    %v1235 = vunpack.c.l.b16 %v1100
    %v1236 = vpack.c.b16 %v1173, %v1172
    %v1237 = vpack.c.b16 %v1175, %v1174
    %v1238 = vpack.c.b16 %v1177, %v1176
    %v1239 = vpack.c.b16 %v1179, %v1178
    %v1240 = vpack.c.b16 %v1181, %v1180
    %v1241 = vpack.c.b16 %v1183, %v1182
    %v1242 = vpack.c.b16 %v1185, %v1184
    %v1243 = vpack.c.b16 %v1187, %v1186
    %v1244 = vpack.c.b16 %v1189, %v1188
    %v1245 = vpack.c.b16 %v1191, %v1190
    %v1246 = vpack.c.b16 %v1193, %v1192
    %v1247 = vpack.c.b16 %v1195, %v1194
    %v1248 = vpack.c.b16 %v1197, %v1196
    %v1249 = vpack.c.b16 %v1199, %v1198
    %v1250 = vpack.c.b16 %v1201, %v1200
    %v1251 = vpack.c.b16 %v1203, %v1202
    %v1252 = vpack.c.b16 %v1205, %v1204
    %v1253 = vpack.c.b16 %v1207, %v1206
    %v1254 = vpack.c.b16 %v1209, %v1208
    %v1255 = vpack.c.b16 %v1211, %v1210
    %v1256 = vpack.c.b16 %v1213, %v1212
    %v1257 = vpack.c.b16 %v1215, %v1214
    %v1258 = vpack.c.b16 %v1217, %v1216
    %v1259 = vpack.c.b16 %v1219, %v1218
    %v1260 = vpack.c.b16 %v1221, %v1220
    %v1261 = vpack.c.b16 %v1223, %v1222
    %v1262 = vpack.c.b16 %v1225, %v1224
    %v1263 = vpack.c.b16 %v1227, %v1226
    %v1264 = vpack.c.b16 %v1229, %v1228
    %v1265 = vpack.c.b16 %v1231, %v1230
    %v1266 = vpack.c.b16 %v1233, %v1232
    %v1267 = vpack.c.b16 %v1235, %v1234
    %1300 = vmatprep.subr.bf16.mxu0 0
    %1301 = vmatpush1.bf16.msra.mxu0 %v1236
    %1302 = vmatprep.subr.bf16.mxu0 0
    %1303 = vmatpush1.bf16.msra.mxu0 %v1237
    %1304 = vmatprep.subr.bf16.mxu0 0
    %1305 = vmatpush1.bf16.msra.mxu0 %v1238
    %1306 = vmatprep.subr.bf16.mxu0 0
    %1307 = vmatpush1.bf16.msra.mxu0 %v1239
    %1308 = vmatprep.subr.bf16.mxu0 0
    %1309 = vmatpush1.bf16.msra.mxu0 %v1240
    %1310 = vmatprep.subr.bf16.mxu0 0
    %1311 = vmatpush1.bf16.msra.mxu0 %v1241
    %1312 = vmatprep.subr.bf16.mxu0 0
    %1313 = vmatpush1.bf16.msra.mxu0 %v1242
    %1314 = vmatprep.subr.bf16.mxu0 0
    %1315 = vmatpush1.bf16.msra.mxu0 %v1243
    %1316 = vmatprep.subr.bf16.mxu0 0
    %1317 = vmatpush1.bf16.msra.mxu0 %v1244
    %1318 = vmatprep.subr.bf16.mxu0 0
    %1319 = vmatpush1.bf16.msra.mxu0 %v1245
    %1320 = vmatprep.subr.bf16.mxu0 0
    %1321 = vmatpush1.bf16.msra.mxu0 %v1246
    %1322 = vmatprep.subr.bf16.mxu0 0
    %1323 = vmatpush1.bf16.msra.mxu0 %v1247
    %1324 = vmatprep.subr.bf16.mxu0 0
    %1325 = vmatpush1.bf16.msra.mxu0 %v1248
    %1326 = vmatprep.subr.bf16.mxu0 0
    %1327 = vmatpush1.bf16.msra.mxu0 %v1249
    %1328 = vmatprep.subr.bf16.mxu0 0
    %1329 = vmatpush1.bf16.msra.mxu0 %v1250
    %1330 = vmatprep.subr.bf16.mxu0 0
    %1331 = vmatpush1.bf16.msra.mxu0 %v1251
    %1332 = vmatprep.mubr.bf16.mxu0 %v1034
    %1333 = vmatmul.mubr.bf16.gmra.mrb[0].mxu0 %v1033
    %v1334 = vpop.f32.mrb[0].mxu0
    %v1335 = vadd.f32 %v1106, %v1334
    %v1336 = vpop.f32.mrb[0].mxu0
    %v1337 = vpop.f32.mrb[0].mxu0
    %v1338 = vadd.f32 %v1106, %v1337
    %v1339 = vpop.f32.mrb[0].mxu0
    %1340 = vdwg.mxu0
    %1341 = vmatprep.subr.bf16.mxu0 0
    %1342 = vmatpush1.bf16.msra.mxu0 %v1252
    %1343 = vmatprep.subr.bf16.mxu0 0
    %1344 = vmatpush1.bf16.msra.mxu0 %v1253
    %1345 = vmatprep.subr.bf16.mxu0 0
    %1346 = vmatpush1.bf16.msra.mxu0 %v1254
    %1347 = vmatprep.subr.bf16.mxu0 0
    %1348 = vmatpush1.bf16.msra.mxu0 %v1255
    %1349 = vmatprep.subr.bf16.mxu0 0
    %1350 = vmatpush1.bf16.msra.mxu0 %v1256
    %1351 = vmatprep.subr.bf16.mxu0 0
    %1352 = vmatpush1.bf16.msra.mxu0 %v1257
    %1353 = vmatprep.subr.bf16.mxu0 0
    %1354 = vmatpush1.bf16.msra.mxu0 %v1258
    %1355 = vmatprep.subr.bf16.mxu0 0
    %1356 = vmatpush1.bf16.msra.mxu0 %v1259
    %1357 = vmatprep.subr.bf16.mxu0 0
    %1358 = vmatpush1.bf16.msra.mxu0 %v1260
    %1359 = vmatprep.subr.bf16.mxu0 0
    %1360 = vmatpush1.bf16.msra.mxu0 %v1261
    %1361 = vmatprep.subr.bf16.mxu0 0
    %1362 = vmatpush1.bf16.msra.mxu0 %v1262
    %1363 = vmatprep.subr.bf16.mxu0 0
    %1364 = vmatpush1.bf16.msra.mxu0 %v1263
    %1365 = vmatprep.subr.bf16.mxu0 0
    %1366 = vmatpush1.bf16.msra.mxu0 %v1264
    %1367 = vmatprep.subr.bf16.mxu0 0
    %1368 = vmatpush1.bf16.msra.mxu0 %v1265
    %1369 = vmatprep.subr.bf16.mxu0 0
    %1370 = vmatpush1.bf16.msra.mxu0 %v1266
    %1371 = vmatprep.subr.bf16.mxu0 0
    %1372 = vmatpush1.bf16.msra.mxu0 %v1267
    %1373 = vmatprep.mubr.bf16.mxu0 %v1036
    %1374 = vmatmul.mubr.bf16.gmra.mrb[0].mxu0 %v1035
    %v1375 = vpop.f32.mrb[0].mxu0
    %v1376 = vadd.f32 %v1335, %v1375
    %v1377 = vpop.f32.mrb[0].mxu0
    %v1378 = vpop.f32.mrb[0].mxu0
    %v1379 = vadd.f32 %v1338, %v1378
    %v1380 = vpop.f32.mrb[0].mxu0
    %1381 = vdwg.mxu0
    %1382 = vst [vmem:[#allocation14] sm:$0xff] %v1376
    %1383 = vst [vmem:[#allocation14 + $0x8] sm:$0xff] %v1379
    // Predicated region
    $region58: #{mlp_pallas.1} parent=1 // pred_check
      _
    $region59: #{mlp_pallas.1} parent=1 // pred_check_branch
      %1385 = sbr.rel (0) target = $region61
    $region60: #{mlp_pallas.1} parent=1 // pred_region
      %s1387 = ssub.s32 256, 256
      %1388 = vsyncadd [#allocation4], %s1387
      %s1389 = sshll.u32 [#allocation14], 4
      %s1390 = int_to_ptr.vmem [resolvable:$true] %s1389
      %1395 = dma.vmem_to_hbm [thread:$0]  %s1390, 256, %s7, [#allocation4], 128, 128, 8
    $region61: #{mlp_pallas.1} parent=1 // pred_fallthru
      _
    // Predicated region
    $region62: #{mlp_pallas.1} parent=1 // pred_check
      _
    $region63: #{mlp_pallas.1} parent=1 // pred_check_branch
      %1397 = sbr.rel (0) target = $region65
    $region64: #{mlp_pallas.1} parent=1 // pred_region
      %1398 = dma.done [#allocation4], 256
    $region65: #{mlp_pallas.1} parent=1 // pred_fallthru
      _
    %1399 = vsyncpa [#allocation3], 1
    %1400 = vsyncpa [#allocation6], 1
    %1401 = vsyncpa [#allocation9], 1
    %1402 = vsyncpa [#allocation12], 1
    %1403 = vsyncpa [#allocation4], 1

// kernel: mlp_pallas.1
$region0: #{mlp_pallas.1}
  #allocation0 [shape = 'u32[]', space=smem, size = 0x4, offset = 0x4, fixed_abs, tag = 'smem constant byte address 0x4 - core index']
  #allocation1 [shape = 'u32[144,128]{1,0:T(1,128)}', space=vmem, size = 0x12000, scoped, tag = 'internal scratch']
  %s0 = inlined_call_operand.hbm [shape: bf16[16,128], index: 0, kind: input, shape index: {}]
  %s1 = inlined_call_operand.hbm [shape: bf16[128,512], index: 1, kind: input, shape index: {}]
  %s2 = inlined_call_operand.hbm [shape: bf16[512,128], index: 2, kind: input, shape index: {}]
  %s3 = inlined_call_operand.hbm [shape: f32[1,128], index: 3, kind: input, shape index: {}]
  %s4 = inlined_call_operand.hbm [shape: bf16[128,512], index: 4, kind: input, shape index: {}]
  %s5 = inlined_call_operand.hbm [shape: bf16[512,128], index: 5, kind: input, shape index: {}]
  %s6 = inlined_call_operand.hbm [shape: f32[1,128], index: 6, kind: input, shape index: {}]
  %s7 = inlined_call_operand.hbm [shape: f32[16,128], index: 7, kind: output, shape index: {}]
  %s8 = sld [smem:[#allocation0]]
  $region66: #{mlp_pallas.1} parent=0
    _
  %s10 = ssub.s32 1, %s8
  %s11 = scalar_select 0, %s10, %s8
  $region1: #{mlp_pallas.1} parent=0
    #allocation2 [shape = 'u8[4096]{0}', space=vmem, size = 0x1000, scoped, tag = 'input window, operand 0, single buffered']
    #allocation3 [shape = 's32[1]{0}', space=sflag, size = 0x4, scoped, tag = 'scoped memory for mlp_pallas.1']
    #allocation4 [shape = 's32[1]{0}', space=sflag, size = 0x4, scoped, tag = 'scoped memory for mlp_pallas.1']
    #allocation5 [shape = 'u8[131072]{0}', space=vmem, size = 0x20000, scoped, tag = 'input window, operand 1, single buffered']
    #allocation6 [shape = 's32[1]{0}', space=sflag, size = 0x4, scoped, tag = 'scoped memory for mlp_pallas.1']
    #allocation7 [shape = 'u8[131072]{0}', space=vmem, size = 0x20000, scoped, tag = 'input window, operand 2, single buffered']
    #allocation8 [shape = 'u8[512]{0}', space=vmem, size = 0x400, scoped, tag = 'input window, operand 3, single buffered']
    #allocation9 [shape = 's32[1]{0}', space=sflag, size = 0x4, scoped, tag = 'scoped memory for mlp_pallas.1']
    #allocation10 [shape = 'u8[131072]{0}', space=vmem, size = 0x20000, scoped, tag = 'input window, operand 4, single buffered']
    #allocation11 [shape = 'u8[131072]{0}', space=vmem, size = 0x20000, scoped, tag = 'input window, operand 5, single buffered']
    #allocation12 [shape = 's32[1]{0}', space=sflag, size = 0x4, scoped, tag = 'scoped memory for mlp_pallas.1']
    #allocation13 [shape = 'u8[512]{0}', space=vmem, size = 0x400, scoped, tag = 'input window, operand 6, single buffered']
    #allocation14 [shape = 'u8[8192]{0}', space=vmem, size = 0x2000, scoped, tag = 'output window, operand 0, single buffered']
    %12 = vsyncpa [#allocation3], 0
    %13 = vsyncpa [#allocation6], 0
    %14 = vsyncpa [#allocation9], 0
    %15 = vsyncpa [#allocation12], 0
    %16 = vsyncpa [#allocation4], 0
    // Predicated region
    $region2: #{mlp_pallas.1} parent=1 // pred_check
      _
    $region3: #{mlp_pallas.1} parent=1 // pred_check_branch
      %18 = sbr.rel (0) target = $region5
    $region4: #{mlp_pallas.1} parent=1 // pred_region
      %s20 = ssub.s32 128, 128
      %21 = vsyncadd [#allocation3], %s20
      %s22 = sshll.u32 [#allocation2], 4
      %s23 = int_to_ptr.vmem [resolvable:$true] %s22
      %28 = dma.hbm_to_vmem [thread:$0]  %s0, 128, %s23, [#allocation3], 64, 64, 4
    $region5: #{mlp_pallas.1} parent=1 // pred_fallthru
      _
    // Predicated region
    $region6: #{mlp_pallas.1} parent=1 // pred_check
      _
    $region7: #{mlp_pallas.1} parent=1 // pred_check_branch
      %30 = sbr.rel (0) target = $region9
    $region8: #{mlp_pallas.1} parent=1 // pred_region
      %s32 = ssub.s32 4096, 4096
      %33 = vsyncadd [#allocation6], %s32
      %s34 = sshll.u32 [#allocation5], 4
      %s35 = int_to_ptr.vmem [resolvable:$true] %s34
      %40 = dma.hbm_to_vmem [thread:$0]  %s1, 4096, %s35, [#allocation6], 256, 256, 16
    $region9: #{mlp_pallas.1} parent=1 // pred_fallthru
      _
    // Predicated region
    $region10: #{mlp_pallas.1} parent=1 // pred_check
      _
    $region11: #{mlp_pallas.1} parent=1 // pred_check_branch
      %42 = sbr.rel (0) target = $region13
    $region12: #{mlp_pallas.1} parent=1 // pred_region
      %s44 = ssub.s32 4096, 4096
      %45 = vsyncadd [#allocation6], %s44
      %s46 = sshll.u32 [#allocation7], 4
      %s47 = int_to_ptr.vmem [resolvable:$true] %s46
      %52 = dma.hbm_to_vmem [thread:$0]  %s2, 4096, %s47, [#allocation6], 64, 64, 4
    $region13: #{mlp_pallas.1} parent=1 // pred_fallthru
      _
    // Predicated region
    $region14: #{mlp_pallas.1} parent=1 // pred_check
      _
    $region15: #{mlp_pallas.1} parent=1 // pred_check_branch
      %54 = sbr.rel (0) target = $region17
    $region16: #{mlp_pallas.1} parent=1 // pred_region
      %s56 = ssub.s32 16, 16
      %57 = vsyncadd [#allocation9], %s56
      %s59 = sshll.u32 [#allocation8], 4
      %s60 = int_to_ptr.vmem [resolvable:$true] %s59
      %62 = dma.hbm_to_vmem [thread:$0]  %s3, 16, %s60, [#allocation9]
    $region17: #{mlp_pallas.1} parent=1 // pred_fallthru
      _
    // Predicated region
    $region18: #{mlp_pallas.1} parent=1 // pred_check
      _
    $region19: #{mlp_pallas.1} parent=1 // pred_check_branch
      %64 = sbr.rel (0) target = $region21
    $region20: #{mlp_pallas.1} parent=1 // pred_region
      %s66 = ssub.s32 4096, 4096
      %67 = vsyncadd [#allocation9], %s66
      %s68 = sshll.u32 [#allocation10], 4
      %s69 = int_to_ptr.vmem [resolvable:$true] %s68
      %74 = dma.hbm_to_vmem [thread:$0]  %s4, 4096, %s69, [#allocation9], 256, 256, 16
    $region21: #{mlp_pallas.1} parent=1 // pred_fallthru
      _
    // Predicated region
    $region22: #{mlp_pallas.1} parent=1 // pred_check
      _
    $region23: #{mlp_pallas.1} parent=1 // pred_check_branch
      %76 = sbr.rel (0) target = $region25
    $region24: #{mlp_pallas.1} parent=1 // pred_region
      %s78 = ssub.s32 4096, 4096
      %79 = vsyncadd [#allocation12], %s78
      %s80 = sshll.u32 [#allocation11], 4
      %s81 = int_to_ptr.vmem [resolvable:$true] %s80
      %86 = dma.hbm_to_vmem [thread:$0]  %s5, 4096, %s81, [#allocation12], 64, 64, 4
    $region25: #{mlp_pallas.1} parent=1 // pred_fallthru
      _
    // Predicated region
    $region26: #{mlp_pallas.1} parent=1 // pred_check
      _
    $region27: #{mlp_pallas.1} parent=1 // pred_check_branch
      %88 = sbr.rel (0) target = $region29
    $region28: #{mlp_pallas.1} parent=1 // pred_region
      %s90 = ssub.s32 16, 16
      %91 = vsyncadd [#allocation12], %s90
      %s93 = sshll.u32 [#allocation13], 4
      %s94 = int_to_ptr.vmem [resolvable:$true] %s93
      %96 = dma.hbm_to_vmem [thread:$0]  %s6, 16, %s94, [#allocation12]
    $region29: #{mlp_pallas.1} parent=1 // pred_fallthru
      _
    // Predicated region
    $region30: #{mlp_pallas.1} parent=1 // pred_check
      _
    $region31: #{mlp_pallas.1} parent=1 // pred_check_branch
      %98 = sbr.rel (0) target = $region33
    $region32: #{mlp_pallas.1} parent=1 // pred_region
      %99 = dma.done [#allocation3], 128
    $region33: #{mlp_pallas.1} parent=1 // pred_fallthru
      _
    // Predicated region
    $region34: #{mlp_pallas.1} parent=1 // pred_check
      _
    $region35: #{mlp_pallas.1} parent=1 // pred_check_branch
      %101 = sbr.rel (0) target = $region37
    $region36: #{mlp_pallas.1} parent=1 // pred_region
      %102 = dma.done [#allocation6], 4096
    $region37: #{mlp_pallas.1} parent=1 // pred_fallthru
      _
    // Predicated region
    $region38: #{mlp_pallas.1} parent=1 // pred_check
      _
    $region39: #{mlp_pallas.1} parent=1 // pred_check_branch
      %104 = sbr.rel (0) target = $region41
    $region40: #{mlp_pallas.1} parent=1 // pred_region
      %105 = dma.done [#allocation6], 4096
    $region41: #{mlp_pallas.1} parent=1 // pred_fallthru
      _
    // Predicated region
    $region42: #{mlp_pallas.1} parent=1 // pred_check
      _
    $region43: #{mlp_pallas.1} parent=1 // pred_check_branch
      %107 = sbr.rel (0) target = $region45
    $region44: #{mlp_pallas.1} parent=1 // pred_region
      %108 = dma.done [#allocation9], 16
    $region45: #{mlp_pallas.1} parent=1 // pred_fallthru
      _
    // Predicated region
    $region46: #{mlp_pallas.1} parent=1 // pred_check
      _
    $region47: #{mlp_pallas.1} parent=1 // pred_check_branch
      %110 = sbr.rel (0) target = $region49
    $region48: #{mlp_pallas.1} parent=1 // pred_region
      %111 = dma.done [#allocation9], 4096
    $region49: #{mlp_pallas.1} parent=1 // pred_fallthru
      _
    // Predicated region
    $region50: #{mlp_pallas.1} parent=1 // pred_check
      _
    $region51: #{mlp_pallas.1} parent=1 // pred_check_branch
      %113 = sbr.rel (0) target = $region53
    $region52: #{mlp_pallas.1} parent=1 // pred_region
      %114 = dma.done [#allocation12], 4096
    $region53: #{mlp_pallas.1} parent=1 // pred_fallthru
      _
    // Predicated region
    $region54: #{mlp_pallas.1} parent=1 // pred_check
      _
    $region55: #{mlp_pallas.1} parent=1 // pred_check_branch
      %116 = sbr.rel (0) target = $region57
    $region56: #{mlp_pallas.1} parent=1 // pred_region
      %117 = dma.done [#allocation12], 16
    $region57: #{mlp_pallas.1} parent=1 // pred_fallthru
      _
    %v119 = vld [vmem:[#allocation2] sm:$0xf]
    %v120 = vld [vmem:[#allocation2 + $0x4] sm:$0xf]
    %v121 = vld [vmem:[#allocation5] sm:$0xff]
    %v122 = vld [vmem:[#allocation5 + $0x8] sm:$0xff]
    %v123 = vld [vmem:[#allocation5 + $0x10] sm:$0xff]
    %v124 = vld [vmem:[#allocation5 + $0x18] sm:$0xff]
    %v125 = vld [vmem:[#allocation5 + $0x20] sm:$0xff]
    %v126 = vld [vmem:[#allocation5 + $0x28] sm:$0xff]
    %v127 = vld [vmem:[#allocation5 + $0x30] sm:$0xff]
    %v128 = vld [vmem:[#allocation5 + $0x38] sm:$0xff]
    %v129 = vld [vmem:[#allocation5 + $0x40] sm:$0xff]
    %v130 = vld [vmem:[#allocation5 + $0x48] sm:$0xff]
    %v131 = vld [vmem:[#allocation5 + $0x50] sm:$0xff]
    %v132 = vld [vmem:[#allocation5 + $0x58] sm:$0xff]
    %v133 = vld [vmem:[#allocation5 + $0x60] sm:$0xff]
    %v134 = vld [vmem:[#allocation5 + $0x68] sm:$0xff]
    %v135 = vld [vmem:[#allocation5 + $0x70] sm:$0xff]
    %v136 = vld [vmem:[#allocation5 + $0x78] sm:$0xff]
    %v137 = vld [vmem:[#allocation5 + $0x80] sm:$0xff]
    %v138 = vld [vmem:[#allocation5 + $0x88] sm:$0xff]
    %v139 = vld [vmem:[#allocation5 + $0x90] sm:$0xff]
    %v140 = vld [vmem:[#allocation5 + $0x98] sm:$0xff]
    %v141 = vld [vmem:[#allocation5 + $0xa0] sm:$0xff]
    %v142 = vld [vmem:[#allocation5 + $0xa8] sm:$0xff]
    %v143 = vld [vmem:[#allocation5 + $0xb0] sm:$0xff]
    %v144 = vld [vmem:[#allocation5 + $0xb8] sm:$0xff]
    %v145 = vld [vmem:[#allocation5 + $0xc0] sm:$0xff]
    %v146 = vld [vmem:[#allocation5 + $0xc8] sm:$0xff]
    %v147 = vld [vmem:[#allocation5 + $0xd0] sm:$0xff]
    %v148 = vld [vmem:[#allocation5 + $0xd8] sm:$0xff]
    %v149 = vld [vmem:[#allocation5 + $0xe0] sm:$0xff]
    %v150 = vld [vmem:[#allocation5 + $0xe8] sm:$0xff]
    %v151 = vld [vmem:[#allocation5 + $0xf0] sm:$0xff]
    %v152 = vld [vmem:[#allocation5 + $0xf8] sm:$0xff]
    %v155 = vunpack.c.l.b16 %v119
    %v156 = vunpack.c.l.b16 %v120
    %v157 = vpack.c.b16 %v156, %v155
    %v191 = vunpack.c.l.b16 %v121
    %v192 = vunpack.c.h.b16 %v121
    %v193 = vunpack.c.l.b16 %v122
    %v194 = vunpack.c.h.b16 %v122
    %v195 = vunpack.c.l.b16 %v123
    %v196 = vunpack.c.h.b16 %v123
    %v197 = vunpack.c.l.b16 %v124
    %v198 = vunpack.c.h.b16 %v124
    %v199 = vunpack.c.l.b16 %v125
    %v200 = vunpack.c.h.b16 %v125
    %v201 = vunpack.c.l.b16 %v126
    %v202 = vunpack.c.h.b16 %v126
    %v203 = vunpack.c.l.b16 %v127
    %v204 = vunpack.c.h.b16 %v127
    %v205 = vunpack.c.l.b16 %v128
    %v206 = vunpack.c.h.b16 %v128
    %v207 = vunpack.c.l.b16 %v129
    %v208 = vunpack.c.h.b16 %v129
    %v209 = vunpack.c.l.b16 %v130
    %v210 = vunpack.c.h.b16 %v130
    %v211 = vunpack.c.l.b16 %v131
    %v212 = vunpack.c.h.b16 %v131
    %v213 = vunpack.c.l.b16 %v132
    %v214 = vunpack.c.h.b16 %v132
    %v215 = vunpack.c.l.b16 %v133
    %v216 = vunpack.c.h.b16 %v133
    %v217 = vunpack.c.l.b16 %v134
    %v218 = vunpack.c.h.b16 %v134
    %v219 = vunpack.c.l.b16 %v135
    %v220 = vunpack.c.h.b16 %v135
    %v221 = vunpack.c.l.b16 %v136
    %v222 = vunpack.c.h.b16 %v136
    %v223 = vunpack.c.l.b16 %v137
    %v224 = vunpack.c.h.b16 %v137
    %v225 = vunpack.c.l.b16 %v138
    %v226 = vunpack.c.h.b16 %v138
    %v227 = vunpack.c.l.b16 %v139
    %v228 = vunpack.c.h.b16 %v139
    %v229 = vunpack.c.l.b16 %v140
    %v230 = vunpack.c.h.b16 %v140
    %v231 = vunpack.c.l.b16 %v141
    %v232 = vunpack.c.h.b16 %v141
    %v233 = vunpack.c.l.b16 %v142
    %v234 = vunpack.c.h.b16 %v142
    %v235 = vunpack.c.l.b16 %v143
    %v236 = vunpack.c.h.b16 %v143
    %v237 = vunpack.c.l.b16 %v144
    %v238 = vunpack.c.h.b16 %v144
    %v239 = vunpack.c.l.b16 %v145
    %v240 = vunpack.c.h.b16 %v145
    %v241 = vunpack.c.l.b16 %v146
    %v242 = vunpack.c.h.b16 %v146
    %v243 = vunpack.c.l.b16 %v147
    %v244 = vunpack.c.h.b16 %v147
    %v245 = vunpack.c.l.b16 %v148
    %v246 = vunpack.c.h.b16 %v148
    %v247 = vunpack.c.l.b16 %v149
    %v248 = vunpack.c.h.b16 %v149
    %v249 = vunpack.c.l.b16 %v150
    %v250 = vunpack.c.h.b16 %v150
    %v251 = vunpack.c.l.b16 %v151
    %v252 = vunpack.c.h.b16 %v151
    %v253 = vunpack.c.l.b16 %v152
    %v254 = vunpack.c.h.b16 %v152
    %v255 = vpack.c.b16 %v195, %v191
    %v256 = vpack.c.b16 %v196, %v192
    %v257 = vpack.c.b16 %v197, %v193
    %v258 = vpack.c.b16 %v198, %v194
    %v259 = vpack.c.b16 %v203, %v199
    %v260 = vpack.c.b16 %v204, %v200
    %v261 = vpack.c.b16 %v205, %v201
    %v262 = vpack.c.b16 %v206, %v202
    %v263 = vpack.c.b16 %v211, %v207
    %v264 = vpack.c.b16 %v212, %v208
    %v265 = vpack.c.b16 %v213, %v209
    %v266 = vpack.c.b16 %v214, %v210
    %v267 = vpack.c.b16 %v219, %v215
    %v268 = vpack.c.b16 %v220, %v216
    %v269 = vpack.c.b16 %v221, %v217
    %v270 = vpack.c.b16 %v222, %v218
    %v271 = vpack.c.b16 %v227, %v223
    %v272 = vpack.c.b16 %v228, %v224
    %v273 = vpack.c.b16 %v229, %v225
    %v274 = vpack.c.b16 %v230, %v226
    %v275 = vpack.c.b16 %v235, %v231
    %v276 = vpack.c.b16 %v236, %v232
    %v277 = vpack.c.b16 %v237, %v233
    %v278 = vpack.c.b16 %v238, %v234
    %v279 = vpack.c.b16 %v243, %v239
    %v280 = vpack.c.b16 %v244, %v240
    %v281 = vpack.c.b16 %v245, %v241
    %v282 = vpack.c.b16 %v246, %v242
    %v283 = vpack.c.b16 %v251, %v247
    %v284 = vpack.c.b16 %v252, %v248
    %v285 = vpack.c.b16 %v253, %v249
    %v286 = vpack.c.b16 %v254, %v250
    %319 = vmatprep.subr.bf16.mxu0 %v256
    %320 = vmatpush1.bf16.msra.mxu0 %v255
    %321 = vmatprep.subr.bf16.mxu0 %v260
    %322 = vmatpush1.bf16.msra.mxu0 %v259
    %323 = vmatprep.subr.bf16.mxu0 %v264
    %324 = vmatpush1.bf16.msra.mxu0 %v263
    %325 = vmatprep.subr.bf16.mxu0 %v268
    %326 = vmatpush1.bf16.msra.mxu0 %v267
    %327 = vmatprep.subr.bf16.mxu0 %v272
    %328 = vmatpush1.bf16.msra.mxu0 %v271
    %329 = vmatprep.subr.bf16.mxu0 %v276
    %330 = vmatpush1.bf16.msra.mxu0 %v275
    %331 = vmatprep.subr.bf16.mxu0 %v280
    %332 = vmatpush1.bf16.msra.mxu0 %v279
    %333 = vmatprep.subr.bf16.mxu0 %v284
    %334 = vmatpush1.bf16.msra.mxu0 %v283
    %335 = vmatprep.subr.bf16.mxu0 0
    %336 = vmatpush1.bf16.msra.mxu0 0
    %337 = vmatprep.subr.bf16.mxu0 0
    %338 = vmatpush1.bf16.msra.mxu0 0
    %339 = vmatprep.subr.bf16.mxu0 0
    %340 = vmatpush1.bf16.msra.mxu0 0
    %341 = vmatprep.subr.bf16.mxu0 0
    %342 = vmatpush1.bf16.msra.mxu0 0
    %343 = vmatprep.subr.bf16.mxu0 0
    %344 = vmatpush1.bf16.msra.mxu0 0
    %345 = vmatprep.subr.bf16.mxu0 0
    %346 = vmatpush1.bf16.msra.mxu0 0
    %347 = vmatprep.subr.bf16.mxu0 0
    %348 = vmatpush1.bf16.msra.mxu0 0
    %349 = vmatprep.subr.bf16.mxu0 0
    %350 = vmatpush1.bf16.msra.mxu0 0
    %351 = vmatprep.mubr.bf16.mxu0 0
    %352 = vmatmul.mubr.bf16.gmra.mrb[0].mxu0 %v157
    %v353 = vpop.f32.mrb[0].mxu0
    %v354 = vadd.f32 0.0, %v353
    %v355 = vpop.f32.mrb[0].mxu0
    %v356 = vadd.f32 0.0, %v355
    %v357 = vpop.f32.mrb[0].mxu0
    %v358 = vadd.f32 0.0, %v357
    %v359 = vpop.f32.mrb[0].mxu0
    %v360 = vadd.f32 0.0, %v359
    %361 = vdwg.mxu0
    %362 = vmatprep.subr.bf16.mxu0 %v258
    %363 = vmatpush1.bf16.msra.mxu0 %v257
    %364 = vmatprep.subr.bf16.mxu0 %v262
    %365 = vmatpush1.bf16.msra.mxu0 %v261
    %366 = vmatprep.subr.bf16.mxu0 %v266
    %367 = vmatpush1.bf16.msra.mxu0 %v265
    %368 = vmatprep.subr.bf16.mxu0 %v270
    %369 = vmatpush1.bf16.msra.mxu0 %v269
    %370 = vmatprep.subr.bf16.mxu0 %v274
    %371 = vmatpush1.bf16.msra.mxu0 %v273
    %372 = vmatprep.subr.bf16.mxu0 %v278
    %373 = vmatpush1.bf16.msra.mxu0 %v277
    %374 = vmatprep.subr.bf16.mxu0 %v282
    %375 = vmatpush1.bf16.msra.mxu0 %v281
    %376 = vmatprep.subr.bf16.mxu0 %v286
    %377 = vmatpush1.bf16.msra.mxu0 %v285
    %378 = vmatprep.subr.bf16.mxu0 0
    %379 = vmatpush1.bf16.msra.mxu0 0
    %380 = vmatprep.subr.bf16.mxu0 0
    %381 = vmatpush1.bf16.msra.mxu0 0
    %382 = vmatprep.subr.bf16.mxu0 0
    %383 = vmatpush1.bf16.msra.mxu0 0
    %384 = vmatprep.subr.bf16.mxu0 0
    %385 = vmatpush1.bf16.msra.mxu0 0
    %386 = vmatprep.subr.bf16.mxu0 0
    %387 = vmatpush1.bf16.msra.mxu0 0
    %388 = vmatprep.subr.bf16.mxu0 0
    %389 = vmatpush1.bf16.msra.mxu0 0
    %390 = vmatprep.subr.bf16.mxu0 0
    %391 = vmatpush1.bf16.msra.mxu0 0
    %392 = vmatprep.subr.bf16.mxu0 0
    %393 = vmatpush1.bf16.msra.mxu0 0
    %394 = vmatprep.mubr.bf16.mxu0 0
    %395 = vmatmul.mubr.bf16.gmra.mrb[0].mxu0 %v157
    %v396 = vpop.f32.mrb[0].mxu0
    %v397 = vadd.f32 0.0, %v396
    %v398 = vpop.f32.mrb[0].mxu0
    %v399 = vadd.f32 0.0, %v398
    %v400 = vpop.f32.mrb[0].mxu0
    %v401 = vadd.f32 0.0, %v400
    %v402 = vpop.f32.mrb[0].mxu0
    %v403 = vadd.f32 0.0, %v402
    %404 = vdwg.mxu0
    %v405 = vpack.c.bf16 %v358, %v354
    %v406 = vpack.c.bf16 %v360, %v356
    %v407 = vpack.c.bf16 %v401, %v397
    %v408 = vpack.c.bf16 %v403, %v399
    %v409 = vld [vmem:[#allocation7] sm:$0xf]
    %v410 = vld [vmem:[#allocation7 + $0x4] sm:$0xf]
    %v411 = vld [vmem:[#allocation7 + $0x8] sm:$0xf]
    %v412 = vld [vmem:[#allocation7 + $0xc] sm:$0xf]
    %v413 = vld [vmem:[#allocation7 + $0x10] sm:$0xf]
    %v414 = vld [vmem:[#allocation7 + $0x14] sm:$0xf]
    %v415 = vld [vmem:[#allocation7 + $0x18] sm:$0xf]
    %v416 = vld [vmem:[#allocation7 + $0x1c] sm:$0xf]
    %v417 = vld [vmem:[#allocation7 + $0x20] sm:$0xf]
    %v418 = vld [vmem:[#allocation7 + $0x24] sm:$0xf]
    %v419 = vld [vmem:[#allocation7 + $0x28] sm:$0xf]
    %v420 = vld [vmem:[#allocation7 + $0x2c] sm:$0xf]
    %v421 = vld [vmem:[#allocation7 + $0x30] sm:$0xf]
    %v422 = vld [vmem:[#allocation7 + $0x34] sm:$0xf]
    %v423 = vld [vmem:[#allocation7 + $0x38] sm:$0xf]
    %v424 = vld [vmem:[#allocation7 + $0x3c] sm:$0xf]
    %v425 = vld [vmem:[#allocation7 + $0x40] sm:$0xf]
    %v426 = vld [vmem:[#allocation7 + $0x44] sm:$0xf]
    %v427 = vld [vmem:[#allocation7 + $0x48] sm:$0xf]
    %v428 = vld [vmem:[#allocation7 + $0x4c] sm:$0xf]
    %v429 = vld [vmem:[#allocation7 + $0x50] sm:$0xf]
    %v430 = vld [vmem:[#allocation7 + $0x54] sm:$0xf]
    %v431 = vld [vmem:[#allocation7 + $0x58] sm:$0xf]
    %v432 = vld [vmem:[#allocation7 + $0x5c] sm:$0xf]
    %v433 = vld [vmem:[#allocation7 + $0x60] sm:$0xf]
    %v434 = vld [vmem:[#allocation7 + $0x64] sm:$0xf]
    %v435 = vld [vmem:[#allocation7 + $0x68] sm:$0xf]
    %v436 = vld [vmem:[#allocation7 + $0x6c] sm:$0xf]
    %v437 = vld [vmem:[#allocation7 + $0x70] sm:$0xf]
    %v438 = vld [vmem:[#allocation7 + $0x74] sm:$0xf]
    %v439 = vld [vmem:[#allocation7 + $0x78] sm:$0xf]
    %v440 = vld [vmem:[#allocation7 + $0x7c] sm:$0xf]
    %v441 = vld [vmem:[#allocation7 + $0x80] sm:$0xf]
    %v442 = vld [vmem:[#allocation7 + $0x84] sm:$0xf]
    %v443 = vld [vmem:[#allocation7 + $0x88] sm:$0xf]
    %v444 = vld [vmem:[#allocation7 + $0x8c] sm:$0xf]
    %v445 = vld [vmem:[#allocation7 + $0x90] sm:$0xf]
    %v446 = vld [vmem:[#allocation7 + $0x94] sm:$0xf]
    %v447 = vld [vmem:[#allocation7 + $0x98] sm:$0xf]
    %v448 = vld [vmem:[#allocation7 + $0x9c] sm:$0xf]
    %v449 = vld [vmem:[#allocation7 + $0xa0] sm:$0xf]
    %v450 = vld [vmem:[#allocation7 + $0xa4] sm:$0xf]
    %v451 = vld [vmem:[#allocation7 + $0xa8] sm:$0xf]
    %v452 = vld [vmem:[#allocation7 + $0xac] sm:$0xf]
    %v453 = vld [vmem:[#allocation7 + $0xb0] sm:$0xf]
    %v454 = vld [vmem:[#allocation7 + $0xb4] sm:$0xf]
    %v455 = vld [vmem:[#allocation7 + $0xb8] sm:$0xf]
    %v456 = vld [vmem:[#allocation7 + $0xbc] sm:$0xf]
    %v457 = vld [vmem:[#allocation7 + $0xc0] sm:$0xf]
    %v458 = vld [vmem:[#allocation7 + $0xc4] sm:$0xf]
    %v459 = vld [vmem:[#allocation7 + $0xc8] sm:$0xf]
    %v460 = vld [vmem:[#allocation7 + $0xcc] sm:$0xf]
    %v461 = vld [vmem:[#allocation7 + $0xd0] sm:$0xf]
    %v462 = vld [vmem:[#allocation7 + $0xd4] sm:$0xf]
    %v463 = vld [vmem:[#allocation7 + $0xd8] sm:$0xf]
    %v464 = vld [vmem:[#allocation7 + $0xdc] sm:$0xf]
    %v465 = vld [vmem:[#allocation7 + $0xe0] sm:$0xf]
    %v466 = vld [vmem:[#allocation7 + $0xe4] sm:$0xf]
    %v467 = vld [vmem:[#allocation7 + $0xe8] sm:$0xf]
    %v468 = vld [vmem:[#allocation7 + $0xec] sm:$0xf]
    %v469 = vld [vmem:[#allocation7 + $0xf0] sm:$0xf]
    %v470 = vld [vmem:[#allocation7 + $0xf4] sm:$0xf]
    %v471 = vld [vmem:[#allocation7 + $0xf8] sm:$0xf]
    %v472 = vld [vmem:[#allocation7 + $0xfc] sm:$0xf]
    %v473 = vld [vmem:[#allocation8] sm:$0x1]
    %v475 = vlaneseq
    %v476 = vshrl.u32 %v475, 7
    %v477 = vsub.s32 0, %v476
    %v478 = vrot.slane %v473, %v477
    %v544 = vunpack.c.l.b16 %v409
    %v545 = vunpack.c.l.b16 %v410
    %v546 = vunpack.c.l.b16 %v411
    %v547 = vunpack.c.l.b16 %v412
    %v548 = vunpack.c.l.b16 %v413
    %v549 = vunpack.c.l.b16 %v414
    %v550 = vunpack.c.l.b16 %v415
    %v551 = vunpack.c.l.b16 %v416
    %v552 = vunpack.c.l.b16 %v417
    %v553 = vunpack.c.l.b16 %v418
    %v554 = vunpack.c.l.b16 %v419
    %v555 = vunpack.c.l.b16 %v420
    %v556 = vunpack.c.l.b16 %v421
    %v557 = vunpack.c.l.b16 %v422
    %v558 = vunpack.c.l.b16 %v423
    %v559 = vunpack.c.l.b16 %v424
    %v560 = vunpack.c.l.b16 %v425
    %v561 = vunpack.c.l.b16 %v426
    %v562 = vunpack.c.l.b16 %v427
    %v563 = vunpack.c.l.b16 %v428
    %v564 = vunpack.c.l.b16 %v429
    %v565 = vunpack.c.l.b16 %v430
    %v566 = vunpack.c.l.b16 %v431
    %v567 = vunpack.c.l.b16 %v432
    %v568 = vunpack.c.l.b16 %v433
    %v569 = vunpack.c.l.b16 %v434
    %v570 = vunpack.c.l.b16 %v435
    %v571 = vunpack.c.l.b16 %v436
    %v572 = vunpack.c.l.b16 %v437
    %v573 = vunpack.c.l.b16 %v438
    %v574 = vunpack.c.l.b16 %v439
    %v575 = vunpack.c.l.b16 %v440
    %v576 = vunpack.c.l.b16 %v441
    %v577 = vunpack.c.l.b16 %v442
    %v578 = vunpack.c.l.b16 %v443
    %v579 = vunpack.c.l.b16 %v444
    %v580 = vunpack.c.l.b16 %v445
    %v581 = vunpack.c.l.b16 %v446
    %v582 = vunpack.c.l.b16 %v447
    %v583 = vunpack.c.l.b16 %v448
    %v584 = vunpack.c.l.b16 %v449
    %v585 = vunpack.c.l.b16 %v450
    %v586 = vunpack.c.l.b16 %v451
    %v587 = vunpack.c.l.b16 %v452
    %v588 = vunpack.c.l.b16 %v453
    %v589 = vunpack.c.l.b16 %v454
    %v590 = vunpack.c.l.b16 %v455
    %v591 = vunpack.c.l.b16 %v456
    %v592 = vunpack.c.l.b16 %v457
    %v593 = vunpack.c.l.b16 %v458
    %v594 = vunpack.c.l.b16 %v459
    %v595 = vunpack.c.l.b16 %v460
    %v596 = vunpack.c.l.b16 %v461
    %v597 = vunpack.c.l.b16 %v462
    %v598 = vunpack.c.l.b16 %v463
    %v599 = vunpack.c.l.b16 %v464
    %v600 = vunpack.c.l.b16 %v465
    %v601 = vunpack.c.l.b16 %v466
    %v602 = vunpack.c.l.b16 %v467
    %v603 = vunpack.c.l.b16 %v468
    %v604 = vunpack.c.l.b16 %v469
    %v605 = vunpack.c.l.b16 %v470
    %v606 = vunpack.c.l.b16 %v471
    %v607 = vunpack.c.l.b16 %v472
    %v608 = vpack.c.b16 %v545, %v544
    %v609 = vpack.c.b16 %v547, %v546
    %v610 = vpack.c.b16 %v549, %v548
    %v611 = vpack.c.b16 %v551, %v550
    %v612 = vpack.c.b16 %v553, %v552
    %v613 = vpack.c.b16 %v555, %v554
    %v614 = vpack.c.b16 %v557, %v556
    %v615 = vpack.c.b16 %v559, %v558
    %v616 = vpack.c.b16 %v561, %v560
    %v617 = vpack.c.b16 %v563, %v562
    %v618 = vpack.c.b16 %v565, %v564
    %v619 = vpack.c.b16 %v567, %v566
    %v620 = vpack.c.b16 %v569, %v568
    %v621 = vpack.c.b16 %v571, %v570
    %v622 = vpack.c.b16 %v573, %v572
    %v623 = vpack.c.b16 %v575, %v574
    %v624 = vpack.c.b16 %v577, %v576
    %v625 = vpack.c.b16 %v579, %v578
    %v626 = vpack.c.b16 %v581, %v580
    %v627 = vpack.c.b16 %v583, %v582
    %v628 = vpack.c.b16 %v585, %v584
    %v629 = vpack.c.b16 %v587, %v586
    %v630 = vpack.c.b16 %v589, %v588
    %v631 = vpack.c.b16 %v591, %v590
    %v632 = vpack.c.b16 %v593, %v592
    %v633 = vpack.c.b16 %v595, %v594
    %v634 = vpack.c.b16 %v597, %v596
    %v635 = vpack.c.b16 %v599, %v598
    %v636 = vpack.c.b16 %v601, %v600
    %v637 = vpack.c.b16 %v603, %v602
    %v638 = vpack.c.b16 %v605, %v604
    %v639 = vpack.c.b16 %v607, %v606
    %672 = vmatprep.subr.bf16.mxu0 0
    %673 = vmatpush1.bf16.msra.mxu0 %v608
    %674 = vmatprep.subr.bf16.mxu0 0
    %675 = vmatpush1.bf16.msra.mxu0 %v609
    %676 = vmatprep.subr.bf16.mxu0 0
    %677 = vmatpush1.bf16.msra.mxu0 %v610
    %678 = vmatprep.subr.bf16.mxu0 0
    %679 = vmatpush1.bf16.msra.mxu0 %v611
    %680 = vmatprep.subr.bf16.mxu0 0
    %681 = vmatpush1.bf16.msra.mxu0 %v612
    %682 = vmatprep.subr.bf16.mxu0 0
    %683 = vmatpush1.bf16.msra.mxu0 %v613
    %684 = vmatprep.subr.bf16.mxu0 0
    %685 = vmatpush1.bf16.msra.mxu0 %v614
    %686 = vmatprep.subr.bf16.mxu0 0
    %687 = vmatpush1.bf16.msra.mxu0 %v615
    %688 = vmatprep.subr.bf16.mxu0 0
    %689 = vmatpush1.bf16.msra.mxu0 %v616
    %690 = vmatprep.subr.bf16.mxu0 0
    %691 = vmatpush1.bf16.msra.mxu0 %v617
    %692 = vmatprep.subr.bf16.mxu0 0
    %693 = vmatpush1.bf16.msra.mxu0 %v618
    %694 = vmatprep.subr.bf16.mxu0 0
    %695 = vmatpush1.bf16.msra.mxu0 %v619
    %696 = vmatprep.subr.bf16.mxu0 0
    %697 = vmatpush1.bf16.msra.mxu0 %v620
    %698 = vmatprep.subr.bf16.mxu0 0
    %699 = vmatpush1.bf16.msra.mxu0 %v621
    %700 = vmatprep.subr.bf16.mxu0 0
    %701 = vmatpush1.bf16.msra.mxu0 %v622
    %702 = vmatprep.subr.bf16.mxu0 0
    %703 = vmatpush1.bf16.msra.mxu0 %v623
    %704 = vmatprep.mubr.bf16.mxu0 %v406
    %705 = vmatmul.mubr.bf16.gmra.mrb[0].mxu0 %v405
    %v706 = vpop.f32.mrb[0].mxu0
    %v707 = vadd.f32 %v478, %v706
    %v708 = vpop.f32.mrb[0].mxu0
    %v709 = vpop.f32.mrb[0].mxu0
    %v710 = vadd.f32 %v478, %v709
    %v711 = vpop.f32.mrb[0].mxu0
    %712 = vdwg.mxu0
    %713 = vmatprep.subr.bf16.mxu0 0
    %714 = vmatpush1.bf16.msra.mxu0 %v624
    %715 = vmatprep.subr.bf16.mxu0 0
    %716 = vmatpush1.bf16.msra.mxu0 %v625
    %717 = vmatprep.subr.bf16.mxu0 0
    %718 = vmatpush1.bf16.msra.mxu0 %v626
    %719 = vmatprep.subr.bf16.mxu0 0
    %720 = vmatpush1.bf16.msra.mxu0 %v627
    %721 = vmatprep.subr.bf16.mxu0 0
    %722 = vmatpush1.bf16.msra.mxu0 %v628
    %723 = vmatprep.subr.bf16.mxu0 0
    %724 = vmatpush1.bf16.msra.mxu0 %v629
    %725 = vmatprep.subr.bf16.mxu0 0
    %726 = vmatpush1.bf16.msra.mxu0 %v630
    %727 = vmatprep.subr.bf16.mxu0 0
    %728 = vmatpush1.bf16.msra.mxu0 %v631
    %729 = vmatprep.subr.bf16.mxu0 0
    %730 = vmatpush1.bf16.msra.mxu0 %v632
    %731 = vmatprep.subr.bf16.mxu0 0
    %732 = vmatpush1.bf16.msra.mxu0 %v633
    %733 = vmatprep.subr.bf16.mxu0 0
    %734 = vmatpush1.bf16.msra.mxu0 %v634
    %735 = vmatprep.subr.bf16.mxu0 0
    %736 = vmatpush1.bf16.msra.mxu0 %v635
    %737 = vmatprep.subr.bf16.mxu0 0
    %738 = vmatpush1.bf16.msra.mxu0 %v636
    %739 = vmatprep.subr.bf16.mxu0 0
    %740 = vmatpush1.bf16.msra.mxu0 %v637
    %741 = vmatprep.subr.bf16.mxu0 0
    %742 = vmatpush1.bf16.msra.mxu0 %v638
    %743 = vmatprep.subr.bf16.mxu0 0
    %744 = vmatpush1.bf16.msra.mxu0 %v639
    %745 = vmatprep.mubr.bf16.mxu0 %v408
    %746 = vmatmul.mubr.bf16.gmra.mrb[0].mxu0 %v407
    %v747 = vpop.f32.mrb[0].mxu0
    %v748 = vadd.f32 %v707, %v747
    %v749 = vpop.f32.mrb[0].mxu0
    %v750 = vpop.f32.mrb[0].mxu0
    %v751 = vadd.f32 %v710, %v750
    %v752 = vpop.f32.mrb[0].mxu0
    %753 = vdwg.mxu0
    %v754 = vpack.c.bf16 %v751, %v748
    %v755 = vld [vmem:[#allocation10] sm:$0xff]
    %v756 = vld [vmem:[#allocation10 + $0x8] sm:$0xff]
    %v757 = vld [vmem:[#allocation10 + $0x10] sm:$0xff]
    %v758 = vld [vmem:[#allocation10 + $0x18] sm:$0xff]
    %v759 = vld [vmem:[#allocation10 + $0x20] sm:$0xff]
    %v760 = vld [vmem:[#allocation10 + $0x28] sm:$0xff]
    %v761 = vld [vmem:[#allocation10 + $0x30] sm:$0xff]
    %v762 = vld [vmem:[#allocation10 + $0x38] sm:$0xff]
    %v763 = vld [vmem:[#allocation10 + $0x40] sm:$0xff]
    %v764 = vld [vmem:[#allocation10 + $0x48] sm:$0xff]
    %v765 = vld [vmem:[#allocation10 + $0x50] sm:$0xff]
    %v766 = vld [vmem:[#allocation10 + $0x58] sm:$0xff]
    %v767 = vld [vmem:[#allocation10 + $0x60] sm:$0xff]
    %v768 = vld [vmem:[#allocation10 + $0x68] sm:$0xff]
    %v769 = vld [vmem:[#allocation10 + $0x70] sm:$0xff]
    %v770 = vld [vmem:[#allocation10 + $0x78] sm:$0xff]
    %v771 = vld [vmem:[#allocation10 + $0x80] sm:$0xff]
    %v772 = vld [vmem:[#allocation10 + $0x88] sm:$0xff]
    %v773 = vld [vmem:[#allocation10 + $0x90] sm:$0xff]
    %v774 = vld [vmem:[#allocation10 + $0x98] sm:$0xff]
    %v775 = vld [vmem:[#allocation10 + $0xa0] sm:$0xff]
    %v776 = vld [vmem:[#allocation10 + $0xa8] sm:$0xff]
    %v777 = vld [vmem:[#allocation10 + $0xb0] sm:$0xff]
    %v778 = vld [vmem:[#allocation10 + $0xb8] sm:$0xff]
    %v779 = vld [vmem:[#allocation10 + $0xc0] sm:$0xff]
    %v780 = vld [vmem:[#allocation10 + $0xc8] sm:$0xff]
    %v781 = vld [vmem:[#allocation10 + $0xd0] sm:$0xff]
    %v782 = vld [vmem:[#allocation10 + $0xd8] sm:$0xff]
    %v783 = vld [vmem:[#allocation10 + $0xe0] sm:$0xff]
    %v784 = vld [vmem:[#allocation10 + $0xe8] sm:$0xff]
    %v785 = vld [vmem:[#allocation10 + $0xf0] sm:$0xff]
    %v786 = vld [vmem:[#allocation10 + $0xf8] sm:$0xff]
    %v819 = vunpack.c.l.b16 %v755
    %v820 = vunpack.c.h.b16 %v755
    %v821 = vunpack.c.l.b16 %v756
    %v822 = vunpack.c.h.b16 %v756
    %v823 = vunpack.c.l.b16 %v757
    %v824 = vunpack.c.h.b16 %v757
    %v825 = vunpack.c.l.b16 %v758
    %v826 = vunpack.c.h.b16 %v758
    %v827 = vunpack.c.l.b16 %v759
    %v828 = vunpack.c.h.b16 %v759
    %v829 = vunpack.c.l.b16 %v760
    %v830 = vunpack.c.h.b16 %v760
    %v831 = vunpack.c.l.b16 %v761
    %v832 = vunpack.c.h.b16 %v761
    %v833 = vunpack.c.l.b16 %v762
    %v834 = vunpack.c.h.b16 %v762
    %v835 = vunpack.c.l.b16 %v763
    %v836 = vunpack.c.h.b16 %v763
    %v837 = vunpack.c.l.b16 %v764
    %v838 = vunpack.c.h.b16 %v764
    %v839 = vunpack.c.l.b16 %v765
    %v840 = vunpack.c.h.b16 %v765
    %v841 = vunpack.c.l.b16 %v766
    %v842 = vunpack.c.h.b16 %v766
    %v843 = vunpack.c.l.b16 %v767
    %v844 = vunpack.c.h.b16 %v767
    %v845 = vunpack.c.l.b16 %v768
    %v846 = vunpack.c.h.b16 %v768
    %v847 = vunpack.c.l.b16 %v769
    %v848 = vunpack.c.h.b16 %v769
    %v849 = vunpack.c.l.b16 %v770
    %v850 = vunpack.c.h.b16 %v770
    %v851 = vunpack.c.l.b16 %v771
    %v852 = vunpack.c.h.b16 %v771
    %v853 = vunpack.c.l.b16 %v772
    %v854 = vunpack.c.h.b16 %v772
    %v855 = vunpack.c.l.b16 %v773
    %v856 = vunpack.c.h.b16 %v773
    %v857 = vunpack.c.l.b16 %v774
    %v858 = vunpack.c.h.b16 %v774
    %v859 = vunpack.c.l.b16 %v775
    %v860 = vunpack.c.h.b16 %v775
    %v861 = vunpack.c.l.b16 %v776
    %v862 = vunpack.c.h.b16 %v776
    %v863 = vunpack.c.l.b16 %v777
    %v864 = vunpack.c.h.b16 %v777
    %v865 = vunpack.c.l.b16 %v778
    %v866 = vunpack.c.h.b16 %v778
    %v867 = vunpack.c.l.b16 %v779
    %v868 = vunpack.c.h.b16 %v779
    %v869 = vunpack.c.l.b16 %v780
    %v870 = vunpack.c.h.b16 %v780
    %v871 = vunpack.c.l.b16 %v781
    %v872 = vunpack.c.h.b16 %v781
    %v873 = vunpack.c.l.b16 %v782
    %v874 = vunpack.c.h.b16 %v782
    %v875 = vunpack.c.l.b16 %v783
    %v876 = vunpack.c.h.b16 %v783
    %v877 = vunpack.c.l.b16 %v784
    %v878 = vunpack.c.h.b16 %v784
    %v879 = vunpack.c.l.b16 %v785
    %v880 = vunpack.c.h.b16 %v785
    %v881 = vunpack.c.l.b16 %v786
    %v882 = vunpack.c.h.b16 %v786
    %v883 = vpack.c.b16 %v823, %v819
    %v884 = vpack.c.b16 %v824, %v820
    %v885 = vpack.c.b16 %v825, %v821
    %v886 = vpack.c.b16 %v826, %v822
    %v887 = vpack.c.b16 %v831, %v827
    %v888 = vpack.c.b16 %v832, %v828
    %v889 = vpack.c.b16 %v833, %v829
    %v890 = vpack.c.b16 %v834, %v830
    %v891 = vpack.c.b16 %v839, %v835
    %v892 = vpack.c.b16 %v840, %v836
    %v893 = vpack.c.b16 %v841, %v837
    %v894 = vpack.c.b16 %v842, %v838
    %v895 = vpack.c.b16 %v847, %v843
    %v896 = vpack.c.b16 %v848, %v844
    %v897 = vpack.c.b16 %v849, %v845
    %v898 = vpack.c.b16 %v850, %v846
    %v899 = vpack.c.b16 %v855, %v851
    %v900 = vpack.c.b16 %v856, %v852
    %v901 = vpack.c.b16 %v857, %v853
    %v902 = vpack.c.b16 %v858, %v854
    %v903 = vpack.c.b16 %v863, %v859
    %v904 = vpack.c.b16 %v864, %v860
    %v905 = vpack.c.b16 %v865, %v861
    %v906 = vpack.c.b16 %v866, %v862
    %v907 = vpack.c.b16 %v871, %v867
    %v908 = vpack.c.b16 %v872, %v868
    %v909 = vpack.c.b16 %v873, %v869
    %v910 = vpack.c.b16 %v874, %v870
    %v911 = vpack.c.b16 %v879, %v875
    %v912 = vpack.c.b16 %v880, %v876
    %v913 = vpack.c.b16 %v881, %v877
    %v914 = vpack.c.b16 %v882, %v878
    %947 = vmatprep.subr.bf16.mxu0 %v884
    %948 = vmatpush1.bf16.msra.mxu0 %v883
    %949 = vmatprep.subr.bf16.mxu0 %v888
    %950 = vmatpush1.bf16.msra.mxu0 %v887
    %951 = vmatprep.subr.bf16.mxu0 %v892
    %952 = vmatpush1.bf16.msra.mxu0 %v891
    %953 = vmatprep.subr.bf16.mxu0 %v896
    %954 = vmatpush1.bf16.msra.mxu0 %v895
    %955 = vmatprep.subr.bf16.mxu0 %v900
    %956 = vmatpush1.bf16.msra.mxu0 %v899
    %957 = vmatprep.subr.bf16.mxu0 %v904
    %958 = vmatpush1.bf16.msra.mxu0 %v903
    %959 = vmatprep.subr.bf16.mxu0 %v908
    %960 = vmatpush1.bf16.msra.mxu0 %v907
    %961 = vmatprep.subr.bf16.mxu0 %v912
    %962 = vmatpush1.bf16.msra.mxu0 %v911
    %963 = vmatprep.subr.bf16.mxu0 0
    %964 = vmatpush1.bf16.msra.mxu0 0
    %965 = vmatprep.subr.bf16.mxu0 0
    %966 = vmatpush1.bf16.msra.mxu0 0
    %967 = vmatprep.subr.bf16.mxu0 0
    %968 = vmatpush1.bf16.msra.mxu0 0
    %969 = vmatprep.subr.bf16.mxu0 0
    %970 = vmatpush1.bf16.msra.mxu0 0
    %971 = vmatprep.subr.bf16.mxu0 0
    %972 = vmatpush1.bf16.msra.mxu0 0
    %973 = vmatprep.subr.bf16.mxu0 0
    %974 = vmatpush1.bf16.msra.mxu0 0
    %975 = vmatprep.subr.bf16.mxu0 0
    %976 = vmatpush1.bf16.msra.mxu0 0
    %977 = vmatprep.subr.bf16.mxu0 0
    %978 = vmatpush1.bf16.msra.mxu0 0
    %979 = vmatprep.mubr.bf16.mxu0 0
    %980 = vmatmul.mubr.bf16.gmra.mrb[0].mxu0 %v754
    %v981 = vpop.f32.mrb[0].mxu0
    %v982 = vadd.f32 0.0, %v981
    %v983 = vpop.f32.mrb[0].mxu0
    %v984 = vadd.f32 0.0, %v983
    %v985 = vpop.f32.mrb[0].mxu0
    %v986 = vadd.f32 0.0, %v985
    %v987 = vpop.f32.mrb[0].mxu0
    %v988 = vadd.f32 0.0, %v987
    %989 = vdwg.mxu0
    %990 = vmatprep.subr.bf16.mxu0 %v886
    %991 = vmatpush1.bf16.msra.mxu0 %v885
    %992 = vmatprep.subr.bf16.mxu0 %v890
    %993 = vmatpush1.bf16.msra.mxu0 %v889
    %994 = vmatprep.subr.bf16.mxu0 %v894
    %995 = vmatpush1.bf16.msra.mxu0 %v893
    %996 = vmatprep.subr.bf16.mxu0 %v898
    %997 = vmatpush1.bf16.msra.mxu0 %v897
    %998 = vmatprep.subr.bf16.mxu0 %v902
    %999 = vmatpush1.bf16.msra.mxu0 %v901
    %1000 = vmatprep.subr.bf16.mxu0 %v906
    %1001 = vmatpush1.bf16.msra.mxu0 %v905
    %1002 = vmatprep.subr.bf16.mxu0 %v910
    %1003 = vmatpush1.bf16.msra.mxu0 %v909
    %1004 = vmatprep.subr.bf16.mxu0 %v914
    %1005 = vmatpush1.bf16.msra.mxu0 %v913
    %1006 = vmatprep.subr.bf16.mxu0 0
    %1007 = vmatpush1.bf16.msra.mxu0 0
    %1008 = vmatprep.subr.bf16.mxu0 0
    %1009 = vmatpush1.bf16.msra.mxu0 0
    %1010 = vmatprep.subr.bf16.mxu0 0
    %1011 = vmatpush1.bf16.msra.mxu0 0
    %1012 = vmatprep.subr.bf16.mxu0 0
    %1013 = vmatpush1.bf16.msra.mxu0 0
    %1014 = vmatprep.subr.bf16.mxu0 0
    %1015 = vmatpush1.bf16.msra.mxu0 0
    %1016 = vmatprep.subr.bf16.mxu0 0
    %1017 = vmatpush1.bf16.msra.mxu0 0
    %1018 = vmatprep.subr.bf16.mxu0 0
    %1019 = vmatpush1.bf16.msra.mxu0 0
    %1020 = vmatprep.subr.bf16.mxu0 0
    %1021 = vmatpush1.bf16.msra.mxu0 0
    %1022 = vmatprep.mubr.bf16.mxu0 0
    %1023 = vmatmul.mubr.bf16.gmra.mrb[0].mxu0 %v754
    %v1024 = vpop.f32.mrb[0].mxu0
    %v1025 = vadd.f32 0.0, %v1024
    %v1026 = vpop.f32.mrb[0].mxu0
    %v1027 = vadd.f32 0.0, %v1026
    %v1028 = vpop.f32.mrb[0].mxu0
    %v1029 = vadd.f32 0.0, %v1028
    %v1030 = vpop.f32.mrb[0].mxu0
    %v1031 = vadd.f32 0.0, %v1030
    %1032 = vdwg.mxu0
    %v1033 = vpack.c.bf16 %v986, %v982
    %v1034 = vpack.c.bf16 %v988, %v984
    %v1035 = vpack.c.bf16 %v1029, %v1025
    %v1036 = vpack.c.bf16 %v1031, %v1027
    %v1037 = vld [vmem:[#allocation11] sm:$0xf]
    %v1038 = vld [vmem:[#allocation11 + $0x4] sm:$0xf]
    %v1039 = vld [vmem:[#allocation11 + $0x8] sm:$0xf]
    %v1040 = vld [vmem:[#allocation11 + $0xc] sm:$0xf]
    %v1041 = vld [vmem:[#allocation11 + $0x10] sm:$0xf]
    %v1042 = vld [vmem:[#allocation11 + $0x14] sm:$0xf]
    %v1043 = vld [vmem:[#allocation11 + $0x18] sm:$0xf]
    %v1044 = vld [vmem:[#allocation11 + $0x1c] sm:$0xf]
    %v1045 = vld [vmem:[#allocation11 + $0x20] sm:$0xf]
    %v1046 = vld [vmem:[#allocation11 + $0x24] sm:$0xf]
    %v1047 = vld [vmem:[#allocation11 + $0x28] sm:$0xf]
    %v1048 = vld [vmem:[#allocation11 + $0x2c] sm:$0xf]
    %v1049 = vld [vmem:[#allocation11 + $0x30] sm:$0xf]
    %v1050 = vld [vmem:[#allocation11 + $0x34] sm:$0xf]
    %v1051 = vld [vmem:[#allocation11 + $0x38] sm:$0xf]
    %v1052 = vld [vmem:[#allocation11 + $0x3c] sm:$0xf]
    %v1053 = vld [vmem:[#allocation11 + $0x40] sm:$0xf]
    %v1054 = vld [vmem:[#allocation11 + $0x44] sm:$0xf]
    %v1055 = vld [vmem:[#allocation11 + $0x48] sm:$0xf]
    %v1056 = vld [vmem:[#allocation11 + $0x4c] sm:$0xf]
    %v1057 = vld [vmem:[#allocation11 + $0x50] sm:$0xf]
    %v1058 = vld [vmem:[#allocation11 + $0x54] sm:$0xf]
    %v1059 = vld [vmem:[#allocation11 + $0x58] sm:$0xf]
    %v1060 = vld [vmem:[#allocation11 + $0x5c] sm:$0xf]
    %v1061 = vld [vmem:[#allocation11 + $0x60] sm:$0xf]
    %v1062 = vld [vmem:[#allocation11 + $0x64] sm:$0xf]
    %v1063 = vld [vmem:[#allocation11 + $0x68] sm:$0xf]
    %v1064 = vld [vmem:[#allocation11 + $0x6c] sm:$0xf]
    %v1065 = vld [vmem:[#allocation11 + $0x70] sm:$0xf]
    %v1066 = vld [vmem:[#allocation11 + $0x74] sm:$0xf]
    %v1067 = vld [vmem:[#allocation11 + $0x78] sm:$0xf]
    %v1068 = vld [vmem:[#allocation11 + $0x7c] sm:$0xf]
    %v1069 = vld [vmem:[#allocation11 + $0x80] sm:$0xf]
    %v1070 = vld [vmem:[#allocation11 + $0x84] sm:$0xf]
    %v1071 = vld [vmem:[#allocation11 + $0x88] sm:$0xf]
    %v1072 = vld [vmem:[#allocation11 + $0x8c] sm:$0xf]
    %v1073 = vld [vmem:[#allocation11 + $0x90] sm:$0xf]
    %v1074 = vld [vmem:[#allocation11 + $0x94] sm:$0xf]
    %v1075 = vld [vmem:[#allocation11 + $0x98] sm:$0xf]
    %v1076 = vld [vmem:[#allocation11 + $0x9c] sm:$0xf]
    %v1077 = vld [vmem:[#allocation11 + $0xa0] sm:$0xf]
    %v1078 = vld [vmem:[#allocation11 + $0xa4] sm:$0xf]
    %v1079 = vld [vmem:[#allocation11 + $0xa8] sm:$0xf]
    %v1080 = vld [vmem:[#allocation11 + $0xac] sm:$0xf]
    %v1081 = vld [vmem:[#allocation11 + $0xb0] sm:$0xf]
    %v1082 = vld [vmem:[#allocation11 + $0xb4] sm:$0xf]
    %v1083 = vld [vmem:[#allocation11 + $0xb8] sm:$0xf]
    %v1084 = vld [vmem:[#allocation11 + $0xbc] sm:$0xf]
    %v1085 = vld [vmem:[#allocation11 + $0xc0] sm:$0xf]
    %v1086 = vld [vmem:[#allocation11 + $0xc4] sm:$0xf]
    %v1087 = vld [vmem:[#allocation11 + $0xc8] sm:$0xf]
    %v1088 = vld [vmem:[#allocation11 + $0xcc] sm:$0xf]
    %v1089 = vld [vmem:[#allocation11 + $0xd0] sm:$0xf]
    %v1090 = vld [vmem:[#allocation11 + $0xd4] sm:$0xf]
    %v1091 = vld [vmem:[#allocation11 + $0xd8] sm:$0xf]
    %v1092 = vld [vmem:[#allocation11 + $0xdc] sm:$0xf]
    %v1093 = vld [vmem:[#allocation11 + $0xe0] sm:$0xf]
    %v1094 = vld [vmem:[#allocation11 + $0xe4] sm:$0xf]
    %v1095 = vld [vmem:[#allocation11 + $0xe8] sm:$0xf]
    %v1096 = vld [vmem:[#allocation11 + $0xec] sm:$0xf]
    %v1097 = vld [vmem:[#allocation11 + $0xf0] sm:$0xf]
    %v1098 = vld [vmem:[#allocation11 + $0xf4] sm:$0xf]
    %v1099 = vld [vmem:[#allocation11 + $0xf8] sm:$0xf]
    %v1100 = vld [vmem:[#allocation11 + $0xfc] sm:$0xf]
    %v1101 = vld [vmem:[#allocation13] sm:$0x1]
    %v1103 = vlaneseq
    %v1104 = vshrl.u32 %v1103, 7
    %v1105 = vsub.s32 0, %v1104
    %v1106 = vrot.slane %v1101, %v1105
    %v1172 = vunpack.c.l.b16 %v1037
    %v1173 = vunpack.c.l.b16 %v1038
    %v1174 = vunpack.c.l.b16 %v1039
    %v1175 = vunpack.c.l.b16 %v1040
    %v1176 = vunpack.c.l.b16 %v1041
    %v1177 = vunpack.c.l.b16 %v1042
    %v1178 = vunpack.c.l.b16 %v1043
    %v1179 = vunpack.c.l.b16 %v1044
    %v1180 = vunpack.c.l.b16 %v1045
    %v1181 = vunpack.c.l.b16 %v1046
    %v1182 = vunpack.c.l.b16 %v1047
    %v1183 = vunpack.c.l.b16 %v1048
    %v1184 = vunpack.c.l.b16 %v1049
    %v1185 = vunpack.c.l.b16 %v1050
    %v1186 = vunpack.c.l.b16 %v1051
    %v1187 = vunpack.c.l.b16 %v1052
    %v1188 = vunpack.c.l.b16 %v1053
    %v1189 = vunpack.c.l.b16 %v1054
    %v1190 = vunpack.c.l.b16 %v1055
    %v1191 = vunpack.c.l.b16 %v1056
    %v1192 = vunpack.c.l.b16 %v1057
    %v1193 = vunpack.c.l.b16 %v1058
    %v1194 = vunpack.c.l.b16 %v1059
    %v1195 = vunpack.c.l.b16 %v1060
    %v1196 = vunpack.c.l.b16 %v1061
    %v1197 = vunpack.c.l.b16 %v1062
    %v1198 = vunpack.c.l.b16 %v1063
    %v1199 = vunpack.c.l.b16 %v1064
    %v1200 = vunpack.c.l.b16 %v1065
    %v1201 = vunpack.c.l.b16 %v1066
    %v1202 = vunpack.c.l.b16 %v1067
    %v1203 = vunpack.c.l.b16 %v1068
    %v1204 = vunpack.c.l.b16 %v1069
    %v1205 = vunpack.c.l.b16 %v1070
    %v1206 = vunpack.c.l.b16 %v1071
    %v1207 = vunpack.c.l.b16 %v1072
    %v1208 = vunpack.c.l.b16 %v1073
    %v1209 = vunpack.c.l.b16 %v1074
    %v1210 = vunpack.c.l.b16 %v1075
    %v1211 = vunpack.c.l.b16 %v1076
    %v1212 = vunpack.c.l.b16 %v1077
    %v1213 = vunpack.c.l.b16 %v1078
    %v1214 = vunpack.c.l.b16 %v1079
    %v1215 = vunpack.c.l.b16 %v1080
    %v1216 = vunpack.c.l.b16 %v1081
    %v1217 = vunpack.c.l.b16 %v1082
    %v1218 = vunpack.c.l.b16 %v1083
    %v1219 = vunpack.c.l.b16 %v1084
    %v1220 = vunpack.c.l.b16 %v1085
    %v1221 = vunpack.c.l.b16 %v1086
    %v1222 = vunpack.c.l.b16 %v1087
    %v1223 = vunpack.c.l.b16 %v1088
    %v1224 = vunpack.c.l.b16 %v1089
    %v1225 = vunpack.c.l.b16 %v1090
    %v1226 = vunpack.c.l.b16 %v1091
    %v1227 = vunpack.c.l.b16 %v1092
    %v1228 = vunpack.c.l.b16 %v1093
    %v1229 = vunpack.c.l.b16 %v1094
    %v1230 = vunpack.c.l.b16 %v1095
    %v1231 = vunpack.c.l.b16 %v1096
    %v1232 = vunpack.c.l.b16 %v1097
    %v1233 = vunpack.c.l.b16 %v1098
    %v1234 = vunpack.c.l.b16 %v1099
    %v1235 = vunpack.c.l.b16 %v1100
    %v1236 = vpack.c.b16 %v1173, %v1172
    %v1237 = vpack.c.b16 %v1175, %v1174
    %v1238 = vpack.c.b16 %v1177, %v1176
    %v1239 = vpack.c.b16 %v1179, %v1178
    %v1240 = vpack.c.b16 %v1181, %v1180
    %v1241 = vpack.c.b16 %v1183, %v1182
    %v1242 = vpack.c.b16 %v1185, %v1184
    %v1243 = vpack.c.b16 %v1187, %v1186
    %v1244 = vpack.c.b16 %v1189, %v1188
    %v1245 = vpack.c.b16 %v1191, %v1190
    %v1246 = vpack.c.b16 %v1193, %v1192
    %v1247 = vpack.c.b16 %v1195, %v1194
    %v1248 = vpack.c.b16 %v1197, %v1196
    %v1249 = vpack.c.b16 %v1199, %v1198
    %v1250 = vpack.c.b16 %v1201, %v1200
    %v1251 = vpack.c.b16 %v1203, %v1202
    %v1252 = vpack.c.b16 %v1205, %v1204
    %v1253 = vpack.c.b16 %v1207, %v1206
    %v1254 = vpack.c.b16 %v1209, %v1208
    %v1255 = vpack.c.b16 %v1211, %v1210
    %v1256 = vpack.c.b16 %v1213, %v1212
    %v1257 = vpack.c.b16 %v1215, %v1214
    %v1258 = vpack.c.b16 %v1217, %v1216
    %v1259 = vpack.c.b16 %v1219, %v1218
    %v1260 = vpack.c.b16 %v1221, %v1220
    %v1261 = vpack.c.b16 %v1223, %v1222
    %v1262 = vpack.c.b16 %v1225, %v1224
    %v1263 = vpack.c.b16 %v1227, %v1226
    %v1264 = vpack.c.b16 %v1229, %v1228
    %v1265 = vpack.c.b16 %v1231, %v1230
    %v1266 = vpack.c.b16 %v1233, %v1232
    %v1267 = vpack.c.b16 %v1235, %v1234
    %1300 = vmatprep.subr.bf16.mxu0 0
    %1301 = vmatpush1.bf16.msra.mxu0 %v1236
    %1302 = vmatprep.subr.bf16.mxu0 0
    %1303 = vmatpush1.bf16.msra.mxu0 %v1237
    %1304 = vmatprep.subr.bf16.mxu0 0
    %1305 = vmatpush1.bf16.msra.mxu0 %v1238
    %1306 = vmatprep.subr.bf16.mxu0 0
    %1307 = vmatpush1.bf16.msra.mxu0 %v1239
    %1308 = vmatprep.subr.bf16.mxu0 0
    %1309 = vmatpush1.bf16.msra.mxu0 %v1240
    %1310 = vmatprep.subr.bf16.mxu0 0
    %1311 = vmatpush1.bf16.msra.mxu0 %v1241
    %1312 = vmatprep.subr.bf16.mxu0 0
    %1313 = vmatpush1.bf16.msra.mxu0 %v1242
    %1314 = vmatprep.subr.bf16.mxu0 0
    %1315 = vmatpush1.bf16.msra.mxu0 %v1243
    %1316 = vmatprep.subr.bf16.mxu0 0
    %1317 = vmatpush1.bf16.msra.mxu0 %v1244
    %1318 = vmatprep.subr.bf16.mxu0 0
    %1319 = vmatpush1.bf16.msra.mxu0 %v1245
    %1320 = vmatprep.subr.bf16.mxu0 0
    %1321 = vmatpush1.bf16.msra.mxu0 %v1246
    %1322 = vmatprep.subr.bf16.mxu0 0
    %1323 = vmatpush1.bf16.msra.mxu0 %v1247
    %1324 = vmatprep.subr.bf16.mxu0 0
    %1325 = vmatpush1.bf16.msra.mxu0 %v1248
    %1326 = vmatprep.subr.bf16.mxu0 0
    %1327 = vmatpush1.bf16.msra.mxu0 %v1249
    %1328 = vmatprep.subr.bf16.mxu0 0
    %1329 = vmatpush1.bf16.msra.mxu0 %v1250
    %1330 = vmatprep.subr.bf16.mxu0 0
    %1331 = vmatpush1.bf16.msra.mxu0 %v1251
    %1332 = vmatprep.mubr.bf16.mxu0 %v1034
    %1333 = vmatmul.mubr.bf16.gmra.mrb[0].mxu0 %v1033
    %v1334 = vpop.f32.mrb[0].mxu0
    %v1335 = vadd.f32 %v1106, %v1334
    %v1336 = vpop.f32.mrb[0].mxu0
    %v1337 = vpop.f32.mrb[0].mxu0
    %v1338 = vadd.f32 %v1106, %v1337
    %v1339 = vpop.f32.mrb[0].mxu0
    %1340 = vdwg.mxu0
    %1341 = vmatprep.subr.bf16.mxu0 0
    %1342 = vmatpush1.bf16.msra.mxu0 %v1252
    %1343 = vmatprep.subr.bf16.mxu0 0
    %1344 = vmatpush1.bf16.msra.mxu0 %v1253
    %1345 = vmatprep.subr.bf16.mxu0 0
    %1346 = vmatpush1.bf16.msra.mxu0 %v1254
    %1347 = vmatprep.subr.bf16.mxu0 0
    %1348 = vmatpush1.bf16.msra.mxu0 %v1255
    %1349 = vmatprep.subr.bf16.mxu0 0
    %1350 = vmatpush1.bf16.msra.mxu0 %v1256
    %1351 = vmatprep.subr.bf16.mxu0 0
    %1352 = vmatpush1.bf16.msra.mxu0 %v1257
    %1353 = vmatprep.subr.bf16.mxu0 0
    %1354 = vmatpush1.bf16.msra.mxu0 %v1258
    %1355 = vmatprep.subr.bf16.mxu0 0
    %1356 = vmatpush1.bf16.msra.mxu0 %v1259
    %1357 = vmatprep.subr.bf16.mxu0 0
    %1358 = vmatpush1.bf16.msra.mxu0 %v1260
    %1359 = vmatprep.subr.bf16.mxu0 0
    %1360 = vmatpush1.bf16.msra.mxu0 %v1261
    %1361 = vmatprep.subr.bf16.mxu0 0
    %1362 = vmatpush1.bf16.msra.mxu0 %v1262
    %1363 = vmatprep.subr.bf16.mxu0 0
    %1364 = vmatpush1.bf16.msra.mxu0 %v1263
    %1365 = vmatprep.subr.bf16.mxu0 0
    %1366 = vmatpush1.bf16.msra.mxu0 %v1264
    %1367 = vmatprep.subr.bf16.mxu0 0
    %1368 = vmatpush1.bf16.msra.mxu0 %v1265
    %1369 = vmatprep.subr.bf16.mxu0 0
    %1370 = vmatpush1.bf16.msra.mxu0 %v1266
    %1371 = vmatprep.subr.bf16.mxu0 0
    %1372 = vmatpush1.bf16.msra.mxu0 %v1267
    %1373 = vmatprep.mubr.bf16.mxu0 %v1036
    %1374 = vmatmul.mubr.bf16.gmra.mrb[0].mxu0 %v1035
    %v1375 = vpop.f32.mrb[0].mxu0
    %v1376 = vadd.f32 %v1335, %v1375
    %v1377 = vpop.f32.mrb[0].mxu0
    %v1378 = vpop.f32.mrb[0].mxu0
    %v1379 = vadd.f32 %v1338, %v1378
    %v1380 = vpop.f32.mrb[0].mxu0
    %1381 = vdwg.mxu0
    %1382 = vst [vmem:[#allocation14] sm:$0xff] %v1376
    %1383 = vst [vmem:[#allocation14 + $0x8] sm:$0xff] %v1379
    // Predicated region
    $region58: #{mlp_pallas.1} parent=1 // pred_check
      _
    $region59: #{mlp_pallas.1} parent=1 // pred_check_branch
      %1385 = sbr.rel (0) target = $region61
    $region60: #{mlp_pallas.1} parent=1 // pred_region
      %s1387 = ssub.s32 256, 256
      %1388 = vsyncadd [#allocation4], %s1387
      %s1389 = sshll.u32 [#allocation14], 4
      %s1390 = int_to_ptr.vmem [resolvable:$true] %s1389
      %1395 = dma.vmem_to_hbm [thread:$0]  %s1390, 256, %s7, [#allocation4], 128, 128, 8
    $region61: #{mlp_pallas.1} parent=1 // pred_fallthru
      _
    // Predicated region
    $region62: #{mlp_pallas.1} parent=1 // pred_check
      _
    $region63: #{mlp_pallas.1} parent=1 // pred_check_branch
      %1397 = sbr.rel (0) target = $region65
    $region64: #{mlp_pallas.1} parent=1 // pred_region
      %1398 = dma.done [#allocation4], 256
    $region65: #{mlp_pallas.1} parent=1 // pred_fallthru
      _
    %1399 = vsyncpa [#allocation3], 1
    %1400 = vsyncpa [#allocation6], 1
    %1401 = vsyncpa [#allocation9], 1
    %1402 = vsyncpa [#allocation12], 1
    %1403 = vsyncpa [#allocation4], 1

</llo_original>
